<compile_context>
chip_gen: v5e
topology: v5e:2x2
jax: 0.10.0
libtpu: 0.0.40
codegen_flags: <defaults>
</compile_context>

<pallas_src>
import functools

import jax
import jax.numpy as jnp
from jax import lax
from jax.experimental import pallas as pl
from jax.experimental.pallas import tpu as pltpu

EPS = 1e-3   # BatchNorm eps used by the module


# ----------------------------------------------------------------------------
# Pallas kernel
# ----------------------------------------------------------------------------
def dab_kernel(x_ref, pcf_ref, pch_ref, w3t_ref, w1x1t_ref, se1_ref, se2_ref,
               out_ref, *, B, H, W, C, C2, d):
    HW = H * W
    BHW = B * HW

    # ---- fold batch onto the lane axis: (C, B*HW) ---------------------------
    xs = [x_ref[b].astype(jnp.float32) for b in range(B)]       # each (C, HW)
    x = jnp.concatenate(xs, axis=1) if B > 1 else xs[0]         # (C, BHW)

    # ---- per-pixel (row, col) indices inside each image (pos % HW) ----------
    pos = lax.broadcasted_iota(jnp.int32, (1, BHW), 1)
    if (HW & (HW - 1)) == 0 and (W & (W - 1)) == 0:             # pow2 fast path
        local = pos & (HW - 1)
        w_idx = local & (W - 1)
        h_idx = local >> (W.bit_length() - 1)
    else:
        local = pos % HW
        w_idx = local % W
        h_idx = local // W

    # ---- hoisted / deduplicated boundary masks ------------------------------
    edge_cache = {}

    def edge(kind, amt):
        key = (kind, amt)
        if key not in edge_cache:
            if kind == "hl":
                m = h_idx < H - amt
            elif kind == "hg":
                m = h_idx >= amt
            elif kind == "wl":
                m = w_idx < W - amt
            else:
                m = w_idx >= amt
            edge_cache[key] = m
        return edge_cache[key]

    mask_cache = {}

    def shift_mask(dh, dw):
        key = (dh, dw)
        if key not in mask_cache:
            conds = []
            if dh > 0:
                conds.append(edge("hl", dh))
            if dh < 0:
                conds.append(edge("hg", -dh))
            if dw > 0:
                conds.append(edge("wl", dw))
            if dw < 0:
                conds.append(edge("wg", -dw))
            m = conds[0]
            for c in conds[1:]:
                m = m & c
            mask_cache[key] = m
        return mask_cache[key]

    def shift2d(v, dh, dw):
        # out[:, h*W + w] = v[:, (h+dh)*W + (w+dw)], zero outside own image.
        s = dh * W + dw
        if s == 0:
            return v
        r = pltpu.roll(v, (-s) % BHW, axis=1)                   # XLU lane rotate
        return jnp.where(shift_mask(dh, dw), r, 0.0)

    def col(ref, k):                                            # per-channel col
        return ref[:, k:k + 1]                                  # (rows, 1)

    def prelu(v, a):
        return jnp.where(v >= 0, v, a * v)

    # ---- bn_relu_1 -----------------------------------------------------------
    t = prelu(x * col(pcf_ref, 0) + col(pcf_ref, 1), col(pcf_ref, 2))

    # ---- conv3x3 (C -> C//2): 9 accumulated MXU matmuls, bf16 operands -------
    w3 = w3t_ref[...].astype(jnp.bfloat16)                      # (9, C2, C)
    acc = None
    for kh in range(3):
        for kw in range(3):
            tap = shift2d(t, kh - 1, kw - 1).astype(jnp.bfloat16)   # (C, BHW)
            part = jnp.dot(w3[kh * 3 + kw], tap,
                           preferred_element_type=jnp.float32)      # (C2, BHW)
            acc = part if acc is None else acc + part
    t = prelu(acc + col(pch_ref, 0), col(pch_ref, 1))

    # ---- depthwise (3,1)/(1,3) convs (optionally dilated): 3-tap MADDs -------
    def dwise(v, k0, dh, dw):
        r = (shift2d(v, -dh, -dw) * col(pch_ref, k0)
             + v * col(pch_ref, k0 + 1)
             + shift2d(v, dh, dw) * col(pch_ref, k0 + 2))
        return prelu(r + col(pch_ref, k0 + 3), col(pch_ref, k0 + 4))

    br1 = dwise(t, 2, 1, 0)            # dconv3x1
    br1 = dwise(br1, 7, 0, 1)          # dconv1x3
    br2 = dwise(t, 12, d, 0)           # ddconv3x1 (dilated)
    br2 = dwise(br2, 17, 0, d)         # ddconv1x3 (dilated)

    # ---- bn_relu_2 -----------------------------------------------------------
    t = prelu((br1 + br2) * col(pch_ref, 22) + col(pch_ref, 23),
              col(pch_ref, 24))

    # ---- conv1x1 (C//2 -> C), bf16 MXU operands, trailing BN bias ------------
    t = jnp.dot(w1x1t_ref[...].astype(jnp.bfloat16), t.astype(jnp.bfloat16),
                preferred_element_type=jnp.float32)             # (C, BHW)
    t = t + col(pcf_ref, 3)

    # ---- SELayer (per image) + residual --------------------------------------
    se1 = se1_ref[...]                                          # (C, hidden)
    se2 = se2_ref[...]                                          # (C, hidden)
    for b in range(B):
        tb = t[:, b * HW:(b + 1) * HW]                          # (C, HW)
        pooled = jnp.mean(tb, axis=1, keepdims=True)            # (C, 1)
        hid = jnp.maximum(
            jnp.sum(se1 * pooled, axis=0, keepdims=True), 0.0)  # (1, hidden)
        z = jnp.sum(se2 * hid, axis=1, keepdims=True)           # (C, 1)
        gate = pl.reciprocal(1.0 + jnp.exp(-z), approx=True)    # sigmoid (EUP)
        out_ref[b] = (tb * gate + xs[b]).astype(out_ref.dtype)


# ----------------------------------------------------------------------------
# Wrapper — single grid step, whole (B, C, HW) slab resident in VMEM
# ----------------------------------------------------------------------------
def dab_forward(x_nchw, kp, *, d=1):
    B, C, H, W = x_nchw.shape
    C2 = C // 2
    HW = H * W
    x_flat = x_nchw.reshape(B, C, HW)          # free reshape, stays NCHW-native
    kern = functools.partial(dab_kernel, B=B, H=H, W=W, C=C, C2=C2, d=d)
    grid_spec = pltpu.PrefetchScalarGridSpec(
        num_scalar_prefetch=0,
        grid=(1,),
        in_specs=[
            pl.BlockSpec((B, C, HW), lambda i: (0, 0, 0)),
            pl.BlockSpec(kp["pcf"].shape, lambda i: (0, 0)),
            pl.BlockSpec(kp["pch"].shape, lambda i: (0, 0)),
            pl.BlockSpec(kp["w3t"].shape, lambda i: (0, 0, 0)),
            pl.BlockSpec(kp["w1x1t"].shape, lambda i: (0, 0)),
            pl.BlockSpec(kp["se1t"].shape, lambda i: (0, 0)),
            pl.BlockSpec(kp["se2"].shape, lambda i: (0, 0)),
        ],
        out_specs=pl.BlockSpec((B, C, HW), lambda i: (0, 0, 0)),
    )
    out = pl.pallas_call(
        kern,
        out_shape=jax.ShapeDtypeStruct((B, C, HW), x_nchw.dtype),
        grid_spec=grid_spec,
    )(x_flat, kp["pcf"], kp["pch"], kp["w3t"], kp["w1x1t"],
      kp["se1t"], kp["se2"])
    return out.reshape(B, C, H, W)


# ----------------------------------------------------------------------------
# Parameter construction (module-style raw params) and host-side folding
# ----------------------------------------------------------------------------
def make_raw_params(key, C, se_hidden):
    C2 = C // 2
    ks = iter(jax.random.split(key, 64))

    def bn(c):
        g = 1.0 + 0.1 * jax.random.normal(next(ks), (c,), jnp.float32)
        b = 0.1 * jax.random.normal(next(ks), (c,), jnp.float32)
        m = 0.1 * jax.random.normal(next(ks), (c,), jnp.float32)
        v = 0.5 + jax.random.uniform(next(ks), (c,), jnp.float32)
        return g, b, m, v

    def prelu_a(c):
        return 0.1 + 0.2 * jax.random.uniform(next(ks), (c,), jnp.float32)

    return dict(
        bn1=bn(C), a1=prelu_a(C),
        w3=0.1 * jax.random.normal(next(ks), (3, 3, C, C2), jnp.float32),
        bn3=bn(C2), a3=prelu_a(C2),
        dw=0.3 * jax.random.normal(next(ks), (4, 3, C2), jnp.float32),
        bnd=[bn(C2) for _ in range(4)],
        ad=[prelu_a(C2) for _ in range(4)],
        bn2=bn(C2), a2=prelu_a(C2),
        w1x1=0.1 * jax.random.normal(next(ks), (C2, C), jnp.float32),
        bnL=bn(C),
        se_w1=0.3 * jax.random.normal(next(ks), (se_hidden, C), jnp.float32),
        se_w2=0.3 * jax.random.normal(next(ks), (C, se_hidden), jnp.float32),
    )


def _fold(g, b, m, v):
    s = g / jnp.sqrt(v + EPS)
    return s, b - m * s


def pack_params(raw, C):
    """Fold BN scales into conv weights; pack per-channel columns for the kernel."""
    C2 = C // 2
    s1, b1 = _fold(*raw["bn1"])
    sL, bL = _fold(*raw["bnL"])
    pcf = jnp.stack([s1, b1, raw["a1"], bL], axis=1)                 # (C, 4)

    s3, b3 = _fold(*raw["bn3"])
    # (3,3,C,C2) HWIO -> per-tap (C2, C), BN scale folded.
    w3t = (jnp.transpose(raw["w3"], (0, 1, 3, 2)).reshape(9, C2, C)
           * s3[None, :, None])                                      # (9, C2, C)

    cols = [b3, raw["a3"]]
    for i in range(4):
        sd, bd = _fold(*raw["bnd"][i])
        for k in range(3):
            cols.append(raw["dw"][i, k] * sd)
        cols.append(bd)
        cols.append(raw["ad"][i])
    s2, b2 = _fold(*raw["bn2"])
    cols += [s2, b2, raw["a2"]]
    pch = jnp.stack(cols, axis=1)                                    # (C2, 25)

    w1x1t = raw["w1x1"].T * sL[:, None]                              # (C, C2)

    return dict(pcf=pcf, pch=pch, w3t=w3t, w1x1t=w1x1t,
                se1t=raw["se_w1"].T, se2=raw["se_w2"])


# ----------------------------------------------------------------------------
# Pure-JAX NCHW reference (same math, lax convolutions, full f32)
# ----------------------------------------------------------------------------
def ref_forward(x, raw, *, d=1):
    C = x.shape[1]
    C2 = C // 2

    def bn(v, p):
        g, b, m, var = p
        s = g / jnp.sqrt(var + EPS)
        return v * s[None, :, None, None] + (b - m * s)[None, :, None, None]

    def prelu(v, a):
        a = a[None, :, None, None]
        return jnp.where(v >= 0, v, a * v)

    def dconv(v, w, kshape, pad, dil):
        rhs = w.reshape(*kshape, 1, C2)
        return lax.conv_general_dilated(
            v, rhs, (1, 1), pad, rhs_dilation=dil,
            dimension_numbers=("NCHW", "HWIO", "NCHW"),
            feature_group_count=C2)

    t = prelu(bn(x, raw["bn1"]), raw["a1"])
    t = lax.conv_general_dilated(
        t, raw["w3"], (1, 1), [(1, 1), (1, 1)],
        dimension_numbers=("NCHW", "HWIO", "NCHW"))
    t = prelu(bn(t, raw["bn3"]), raw["a3"])

    dw = raw["dw"]
    br1 = prelu(bn(dconv(t, dw[0], (3, 1), [(1, 1), (0, 0)], (1, 1)),
                   raw["bnd"][0]), raw["ad"][0])
    br1 = prelu(bn(dconv(br1, dw[1], (1, 3), [(0, 0), (1, 1)], (1, 1)),
                   raw["bnd"][1]), raw["ad"][1])
    br2 = prelu(bn(dconv(t, dw[2], (3, 1), [(d, d), (0, 0)], (d, 1)),
                   raw["bnd"][2]), raw["ad"][2])
    br2 = prelu(bn(dconv(br2, dw[3], (1, 3), [(0, 0), (d, d)], (1, d)),
                   raw["bnd"][3]), raw["ad"][3])

    o = prelu(bn(br1 + br2, raw["bn2"]), raw["a2"])
    o = jnp.einsum("bchw,cd->bdhw", o, raw["w1x1"])
    o = bn(o, raw["bnL"])

    pooled = jnp.mean(o, axis=(2, 3))                    # (B, C)
    hid = jnp.maximum(pooled @ raw["se_w1"].T, 0.0)      # (B, h)
    gate = jax.nn.sigmoid(hid @ raw["se_w2"].T)          # (B, C)
    o = o * gate[:, :, None, None]
    return o + x


if __name__ == "__main__":
    B, C, H, W = 2, 16, 16, 16          # NCHW, matching the PyTorch module
    d = 2                               # dilation of the ddconv branch
    se_hidden = max(1, C // 4)

    key = jax.random.PRNGKey(0)
    kx, kp = jax.random.split(key)
    x = jax.random.normal(kx, (B, C, H, W), jnp.float32)
    raw = make_raw_params(kp, C, se_hidden)
    kparams = pack_params(raw, C)

    out = dab_forward(x, kparams, d=d)
    out = jax.block_until_ready(out)

    ref = ref_forward(x, raw, d=d)
    err = float(jnp.max(jnp.abs(out - ref)))
    assert out.shape == x.shape
    # Tolerance loosened vs. the all-f32 version: the two matmuls now use bf16
    # MXU operands (with f32 accumulation) per the perf review.
    assert err < 5e-2, f"max abs err {err}"
    print("KERNEL_OK")
</pallas_src>

<mosaic_0001>
module attributes {stable_mosaic.version = 11 : i64} {
  func.func @dab_kernel(%arg0: i32, %arg1: memref<2x16x256xf32, #tpu.memory_space<vmem>>, %arg2: memref<16x4xf32, #tpu.memory_space<vmem>>, %arg3: memref<8x25xf32, #tpu.memory_space<vmem>>, %arg4: memref<9x8x16xf32, #tpu.memory_space<vmem>>, %arg5: memref<16x8xf32, #tpu.memory_space<vmem>>, %arg6: memref<16x4xf32, #tpu.memory_space<vmem>>, %arg7: memref<16x4xf32, #tpu.memory_space<vmem>>, %arg8: memref<2x16x256xf32, #tpu.memory_space<vmem>>) attributes {dimension_semantics = [#tpu.dimension_semantics<arbitrary>], iteration_bounds = array<i64: 1>, scalar_prefetch = 0 : i64, scratch_operands = 0 : i64, tpu.core_type = #tpu.core_type<tc>, window_params = [{pipeline_mode = #tpu.pipeline_mode<synchronous>, transform_indices = @transform_0, window_bounds = array<i64: 2, 16, 256>}, {pipeline_mode = #tpu.pipeline_mode<synchronous>, transform_indices = @transform_1, window_bounds = array<i64: 16, 4>}, {pipeline_mode = #tpu.pipeline_mode<synchronous>, transform_indices = @transform_2, window_bounds = array<i64: 8, 25>}, {pipeline_mode = #tpu.pipeline_mode<synchronous>, transform_indices = @transform_3, window_bounds = array<i64: 9, 8, 16>}, {pipeline_mode = #tpu.pipeline_mode<synchronous>, transform_indices = @transform_4, window_bounds = array<i64: 16, 8>}, {pipeline_mode = #tpu.pipeline_mode<synchronous>, transform_indices = @transform_5, window_bounds = array<i64: 16, 4>}, {pipeline_mode = #tpu.pipeline_mode<synchronous>, transform_indices = @transform_6, window_bounds = array<i64: 16, 4>}, {pipeline_mode = #tpu.pipeline_mode<synchronous>, transform_indices = @transform_7, window_bounds = array<i64: 2, 16, 256>}]} {
    %c0 = arith.constant 0 : index
    %c0_0 = arith.constant 0 : index
    %c0_1 = arith.constant 0 : index
    %0 = vector.load %arg1[%c0, %c0_0, %c0_1] : memref<2x16x256xf32, #tpu.memory_space<vmem>>, vector<1x16x256xf32>
    %1 = vector.shape_cast %0 : vector<1x16x256xf32> to vector<16x256xf32>
    %c1 = arith.constant 1 : index
    %c0_2 = arith.constant 0 : index
    %c0_3 = arith.constant 0 : index
    %2 = vector.load %arg1[%c1, %c0_2, %c0_3] : memref<2x16x256xf32, #tpu.memory_space<vmem>>, vector<1x16x256xf32>
    %3 = vector.shape_cast %2 : vector<1x16x256xf32> to vector<16x256xf32>
    %4 = tpu.concatenate %1, %3 in 1 : vector<16x256xf32>, vector<16x256xf32> -> vector<16x512xf32>
    %5 = tpu.iota {dimensions = array<i32: 1>} : vector<1x512xi32>
    %c255_i32 = arith.constant 255 : i32
    %6 = vector.broadcast %c255_i32 : i32 to vector<1x512xi32>
    %7 = arith.andi %5, %6 : vector<1x512xi32>
    %c15_i32 = arith.constant 15 : i32
    %8 = vector.broadcast %c15_i32 : i32 to vector<1x512xi32>
    %9 = arith.andi %7, %8 : vector<1x512xi32>
    %c4_i32 = arith.constant 4 : i32
    %10 = vector.broadcast %c4_i32 : i32 to vector<1x512xi32>
    %11 = arith.shrsi %7, %10 : vector<1x512xi32>
    %c0_4 = arith.constant 0 : index
    %c0_5 = arith.constant 0 : index
    %12 = vector.load %arg2[%c0_4, %c0_5] : memref<16x4xf32, #tpu.memory_space<vmem>>, vector<16x1xf32>
    %13 = vector.broadcast %12 : vector<16x1xf32> to vector<16x512xf32>
    %14 = arith.mulf %4, %13 : vector<16x512xf32>
    %c0_6 = arith.constant 0 : index
    %c1_7 = arith.constant 1 : index
    %15 = vector.load %arg2[%c0_6, %c1_7] : memref<16x4xf32, #tpu.memory_space<vmem>>, vector<16x1xf32>
    %16 = vector.broadcast %15 : vector<16x1xf32> to vector<16x512xf32>
    %17 = arith.addf %14, %16 : vector<16x512xf32>
    %c0_8 = arith.constant 0 : index
    %c2 = arith.constant 2 : index
    %18 = vector.load %arg2[%c0_8, %c2] : memref<16x4xf32, #tpu.memory_space<vmem>>, vector<16x1xf32>
    %cst = arith.constant 0.000000e+00 : f32
    %19 = vector.broadcast %cst : f32 to vector<16x512xf32>
    %20 = arith.cmpf oge, %17, %19 : vector<16x512xf32>
    %21 = vector.broadcast %18 : vector<16x1xf32> to vector<16x512xf32>
    %22 = arith.mulf %21, %17 : vector<16x512xf32>
    %23 = arith.select %20, %17, %22 : vector<16x512xi1>, vector<16x512xf32>
    %c0_9 = arith.constant 0 : index
    %c0_10 = arith.constant 0 : index
    %c0_11 = arith.constant 0 : index
    %24 = vector.load %arg4[%c0_9, %c0_10, %c0_11] : memref<9x8x16xf32, #tpu.memory_space<vmem>>, vector<9x8x16xf32>
    %25 = arith.truncf %24 : vector<9x8x16xf32> to vector<9x8x16xbf16>
    %c17_i32 = arith.constant 17 : i32
    %26 = tpu.dynamic_rotate %23 by %c17_i32 dim 1 : vector<16x512xf32>, i32 -> vector<16x512xf32>
    %c1_i32 = arith.constant 1 : i32
    %27 = vector.broadcast %c1_i32 : i32 to vector<1x512xi32>
    %28 = arith.cmpi sge, %11, %27 : vector<1x512xi32>
    %c1_i32_12 = arith.constant 1 : i32
    %29 = vector.broadcast %c1_i32_12 : i32 to vector<1x512xi32>
    %30 = arith.cmpi sge, %9, %29 : vector<1x512xi32>
    %31 = arith.andi %28, %30 : vector<1x512xi1>
    %cst_13 = arith.constant 0.000000e+00 : f32
    %32 = vector.shape_cast %31 : vector<1x512xi1> to vector<1x512xi1>
    %33 = vector.broadcast %32 : vector<1x512xi1> to vector<16x512xi1>
    %34 = vector.broadcast %cst_13 : f32 to vector<16x512xf32>
    %35 = arith.select %33, %26, %34 : vector<16x512xi1>, vector<16x512xf32>
    %36 = arith.truncf %35 : vector<16x512xf32> to vector<16x512xbf16>
    %37 = vector.extract_strided_slice %25 {offsets = [0, 0, 0], sizes = [1, 8, 16], strides = [1, 1, 1]} : vector<9x8x16xbf16> to vector<1x8x16xbf16>
    %38 = vector.shape_cast %37 : vector<1x8x16xbf16> to vector<8x16xbf16>
    %cst_14 = arith.constant dense<0.000000e+00> : vector<8x512xf32>
    %39 = tpu.matmul %38, %36, %cst_14 {dimension_numbers = #tpu.dot_dimension_numbers<[1], [0], [0], [1], [0, 0, 1, 1], [], []>} : vector<8x16xbf16>, vector<16x512xbf16>, vector<8x512xf32> -> vector<8x512xf32>
    %c16_i32 = arith.constant 16 : i32
    %40 = tpu.dynamic_rotate %23 by %c16_i32 dim 1 : vector<16x512xf32>, i32 -> vector<16x512xf32>
    %cst_15 = arith.constant 0.000000e+00 : f32
    %41 = vector.shape_cast %28 : vector<1x512xi1> to vector<1x512xi1>
    %42 = vector.broadcast %41 : vector<1x512xi1> to vector<16x512xi1>
    %43 = vector.broadcast %cst_15 : f32 to vector<16x512xf32>
    %44 = arith.select %42, %40, %43 : vector<16x512xi1>, vector<16x512xf32>
    %45 = arith.truncf %44 : vector<16x512xf32> to vector<16x512xbf16>
    %46 = vector.extract_strided_slice %25 {offsets = [1, 0, 0], sizes = [1, 8, 16], strides = [1, 1, 1]} : vector<9x8x16xbf16> to vector<1x8x16xbf16>
    %47 = vector.shape_cast %46 : vector<1x8x16xbf16> to vector<8x16xbf16>
    %cst_16 = arith.constant dense<0.000000e+00> : vector<8x512xf32>
    %48 = tpu.matmul %47, %45, %cst_16 {dimension_numbers = #tpu.dot_dimension_numbers<[1], [0], [0], [1], [0, 0, 1, 1], [], []>} : vector<8x16xbf16>, vector<16x512xbf16>, vector<8x512xf32> -> vector<8x512xf32>
    %49 = arith.addf %39, %48 : vector<8x512xf32>
    %c15_i32_17 = arith.constant 15 : i32
    %50 = tpu.dynamic_rotate %23 by %c15_i32_17 dim 1 : vector<16x512xf32>, i32 -> vector<16x512xf32>
    %c15_i32_18 = arith.constant 15 : i32
    %51 = vector.broadcast %c15_i32_18 : i32 to vector<1x512xi32>
    %52 = arith.cmpi slt, %9, %51 : vector<1x512xi32>
    %53 = arith.andi %28, %52 : vector<1x512xi1>
    %cst_19 = arith.constant 0.000000e+00 : f32
    %54 = vector.shape_cast %53 : vector<1x512xi1> to vector<1x512xi1>
    %55 = vector.broadcast %54 : vector<1x512xi1> to vector<16x512xi1>
    %56 = vector.broadcast %cst_19 : f32 to vector<16x512xf32>
    %57 = arith.select %55, %50, %56 : vector<16x512xi1>, vector<16x512xf32>
    %58 = arith.truncf %57 : vector<16x512xf32> to vector<16x512xbf16>
    %59 = vector.extract_strided_slice %25 {offsets = [2, 0, 0], sizes = [1, 8, 16], strides = [1, 1, 1]} : vector<9x8x16xbf16> to vector<1x8x16xbf16>
    %60 = vector.shape_cast %59 : vector<1x8x16xbf16> to vector<8x16xbf16>
    %cst_20 = arith.constant dense<0.000000e+00> : vector<8x512xf32>
    %61 = tpu.matmul %60, %58, %cst_20 {dimension_numbers = #tpu.dot_dimension_numbers<[1], [0], [0], [1], [0, 0, 1, 1], [], []>} : vector<8x16xbf16>, vector<16x512xbf16>, vector<8x512xf32> -> vector<8x512xf32>
    %62 = arith.addf %49, %61 : vector<8x512xf32>
    %c1_i32_21 = arith.constant 1 : i32
    %63 = tpu.dynamic_rotate %23 by %c1_i32_21 dim 1 : vector<16x512xf32>, i32 -> vector<16x512xf32>
    %cst_22 = arith.constant 0.000000e+00 : f32
    %64 = vector.shape_cast %30 : vector<1x512xi1> to vector<1x512xi1>
    %65 = vector.broadcast %64 : vector<1x512xi1> to vector<16x512xi1>
    %66 = vector.broadcast %cst_22 : f32 to vector<16x512xf32>
    %67 = arith.select %65, %63, %66 : vector<16x512xi1>, vector<16x512xf32>
    %68 = arith.truncf %67 : vector<16x512xf32> to vector<16x512xbf16>
    %69 = vector.extract_strided_slice %25 {offsets = [3, 0, 0], sizes = [1, 8, 16], strides = [1, 1, 1]} : vector<9x8x16xbf16> to vector<1x8x16xbf16>
    %70 = vector.shape_cast %69 : vector<1x8x16xbf16> to vector<8x16xbf16>
    %cst_23 = arith.constant dense<0.000000e+00> : vector<8x512xf32>
    %71 = tpu.matmul %70, %68, %cst_23 {dimension_numbers = #tpu.dot_dimension_numbers<[1], [0], [0], [1], [0, 0, 1, 1], [], []>} : vector<8x16xbf16>, vector<16x512xbf16>, vector<8x512xf32> -> vector<8x512xf32>
    %72 = arith.addf %62, %71 : vector<8x512xf32>
    %73 = arith.truncf %23 : vector<16x512xf32> to vector<16x512xbf16>
    %74 = vector.extract_strided_slice %25 {offsets = [4, 0, 0], sizes = [1, 8, 16], strides = [1, 1, 1]} : vector<9x8x16xbf16> to vector<1x8x16xbf16>
    %75 = vector.shape_cast %74 : vector<1x8x16xbf16> to vector<8x16xbf16>
    %cst_24 = arith.constant dense<0.000000e+00> : vector<8x512xf32>
    %76 = tpu.matmul %75, %73, %cst_24 {dimension_numbers = #tpu.dot_dimension_numbers<[1], [0], [0], [1], [0, 0, 1, 1], [], []>} : vector<8x16xbf16>, vector<16x512xbf16>, vector<8x512xf32> -> vector<8x512xf32>
    %77 = arith.addf %72, %76 : vector<8x512xf32>
    %c511_i32 = arith.constant 511 : i32
    %78 = tpu.dynamic_rotate %23 by %c511_i32 dim 1 : vector<16x512xf32>, i32 -> vector<16x512xf32>
    %cst_25 = arith.constant 0.000000e+00 : f32
    %79 = vector.shape_cast %52 : vector<1x512xi1> to vector<1x512xi1>
    %80 = vector.broadcast %79 : vector<1x512xi1> to vector<16x512xi1>
    %81 = vector.broadcast %cst_25 : f32 to vector<16x512xf32>
    %82 = arith.select %80, %78, %81 : vector<16x512xi1>, vector<16x512xf32>
    %83 = arith.truncf %82 : vector<16x512xf32> to vector<16x512xbf16>
    %84 = vector.extract_strided_slice %25 {offsets = [5, 0, 0], sizes = [1, 8, 16], strides = [1, 1, 1]} : vector<9x8x16xbf16> to vector<1x8x16xbf16>
    %85 = vector.shape_cast %84 : vector<1x8x16xbf16> to vector<8x16xbf16>
    %cst_26 = arith.constant dense<0.000000e+00> : vector<8x512xf32>
    %86 = tpu.matmul %85, %83, %cst_26 {dimension_numbers = #tpu.dot_dimension_numbers<[1], [0], [0], [1], [0, 0, 1, 1], [], []>} : vector<8x16xbf16>, vector<16x512xbf16>, vector<8x512xf32> -> vector<8x512xf32>
    %87 = arith.addf %77, %86 : vector<8x512xf32>
    %c497_i32 = arith.constant 497 : i32
    %88 = tpu.dynamic_rotate %23 by %c497_i32 dim 1 : vector<16x512xf32>, i32 -> vector<16x512xf32>
    %c15_i32_27 = arith.constant 15 : i32
    %89 = vector.broadcast %c15_i32_27 : i32 to vector<1x512xi32>
    %90 = arith.cmpi slt, %11, %89 : vector<1x512xi32>
    %91 = arith.andi %90, %30 : vector<1x512xi1>
    %cst_28 = arith.constant 0.000000e+00 : f32
    %92 = vector.shape_cast %91 : vector<1x512xi1> to vector<1x512xi1>
    %93 = vector.broadcast %92 : vector<1x512xi1> to vector<16x512xi1>
    %94 = vector.broadcast %cst_28 : f32 to vector<16x512xf32>
    %95 = arith.select %93, %88, %94 : vector<16x512xi1>, vector<16x512xf32>
    %96 = arith.truncf %95 : vector<16x512xf32> to vector<16x512xbf16>
    %97 = vector.extract_strided_slice %25 {offsets = [6, 0, 0], sizes = [1, 8, 16], strides = [1, 1, 1]} : vector<9x8x16xbf16> to vector<1x8x16xbf16>
    %98 = vector.shape_cast %97 : vector<1x8x16xbf16> to vector<8x16xbf16>
    %cst_29 = arith.constant dense<0.000000e+00> : vector<8x512xf32>
    %99 = tpu.matmul %98, %96, %cst_29 {dimension_numbers = #tpu.dot_dimension_numbers<[1], [0], [0], [1], [0, 0, 1, 1], [], []>} : vector<8x16xbf16>, vector<16x512xbf16>, vector<8x512xf32> -> vector<8x512xf32>
    %100 = arith.addf %87, %99 : vector<8x512xf32>
    %c496_i32 = arith.constant 496 : i32
    %101 = tpu.dynamic_rotate %23 by %c496_i32 dim 1 : vector<16x512xf32>, i32 -> vector<16x512xf32>
    %cst_30 = arith.constant 0.000000e+00 : f32
    %102 = vector.shape_cast %90 : vector<1x512xi1> to vector<1x512xi1>
    %103 = vector.broadcast %102 : vector<1x512xi1> to vector<16x512xi1>
    %104 = vector.broadcast %cst_30 : f32 to vector<16x512xf32>
    %105 = arith.select %103, %101, %104 : vector<16x512xi1>, vector<16x512xf32>
    %106 = arith.truncf %105 : vector<16x512xf32> to vector<16x512xbf16>
    %107 = vector.extract_strided_slice %25 {offsets = [7, 0, 0], sizes = [1, 8, 16], strides = [1, 1, 1]} : vector<9x8x16xbf16> to vector<1x8x16xbf16>
    %108 = vector.shape_cast %107 : vector<1x8x16xbf16> to vector<8x16xbf16>
    %cst_31 = arith.constant dense<0.000000e+00> : vector<8x512xf32>
    %109 = tpu.matmul %108, %106, %cst_31 {dimension_numbers = #tpu.dot_dimension_numbers<[1], [0], [0], [1], [0, 0, 1, 1], [], []>} : vector<8x16xbf16>, vector<16x512xbf16>, vector<8x512xf32> -> vector<8x512xf32>
    %110 = arith.addf %100, %109 : vector<8x512xf32>
    %c495_i32 = arith.constant 495 : i32
    %111 = tpu.dynamic_rotate %23 by %c495_i32 dim 1 : vector<16x512xf32>, i32 -> vector<16x512xf32>
    %112 = arith.andi %90, %52 : vector<1x512xi1>
    %cst_32 = arith.constant 0.000000e+00 : f32
    %113 = vector.shape_cast %112 : vector<1x512xi1> to vector<1x512xi1>
    %114 = vector.broadcast %113 : vector<1x512xi1> to vector<16x512xi1>
    %115 = vector.broadcast %cst_32 : f32 to vector<16x512xf32>
    %116 = arith.select %114, %111, %115 : vector<16x512xi1>, vector<16x512xf32>
    %117 = arith.truncf %116 : vector<16x512xf32> to vector<16x512xbf16>
    %118 = vector.extract_strided_slice %25 {offsets = [8, 0, 0], sizes = [1, 8, 16], strides = [1, 1, 1]} : vector<9x8x16xbf16> to vector<1x8x16xbf16>
    %119 = vector.shape_cast %118 : vector<1x8x16xbf16> to vector<8x16xbf16>
    %cst_33 = arith.constant dense<0.000000e+00> : vector<8x512xf32>
    %120 = tpu.matmul %119, %117, %cst_33 {dimension_numbers = #tpu.dot_dimension_numbers<[1], [0], [0], [1], [0, 0, 1, 1], [], []>} : vector<8x16xbf16>, vector<16x512xbf16>, vector<8x512xf32> -> vector<8x512xf32>
    %121 = arith.addf %110, %120 : vector<8x512xf32>
    %c0_34 = arith.constant 0 : index
    %c0_35 = arith.constant 0 : index
    %122 = vector.load %arg3[%c0_34, %c0_35] : memref<8x25xf32, #tpu.memory_space<vmem>>, vector<8x1xf32>
    %123 = vector.broadcast %122 : vector<8x1xf32> to vector<8x512xf32>
    %124 = arith.addf %121, %123 : vector<8x512xf32>
    %c0_36 = arith.constant 0 : index
    %c1_37 = arith.constant 1 : index
    %125 = vector.load %arg3[%c0_36, %c1_37] : memref<8x25xf32, #tpu.memory_space<vmem>>, vector<8x1xf32>
    %cst_38 = arith.constant 0.000000e+00 : f32
    %126 = vector.broadcast %cst_38 : f32 to vector<8x512xf32>
    %127 = arith.cmpf oge, %124, %126 : vector<8x512xf32>
    %128 = vector.broadcast %125 : vector<8x1xf32> to vector<8x512xf32>
    %129 = arith.mulf %128, %124 : vector<8x512xf32>
    %130 = arith.select %127, %124, %129 : vector<8x512xi1>, vector<8x512xf32>
    %c16_i32_39 = arith.constant 16 : i32
    %131 = tpu.dynamic_rotate %130 by %c16_i32_39 dim 1 : vector<8x512xf32>, i32 -> vector<8x512xf32>
    %cst_40 = arith.constant 0.000000e+00 : f32
    %132 = vector.shape_cast %28 : vector<1x512xi1> to vector<1x512xi1>
    %133 = vector.broadcast %132 : vector<1x512xi1> to vector<8x512xi1>
    %134 = vector.broadcast %cst_40 : f32 to vector<8x512xf32>
    %135 = arith.select %133, %131, %134 : vector<8x512xi1>, vector<8x512xf32>
    %c0_41 = arith.constant 0 : index
    %c2_42 = arith.constant 2 : index
    %136 = vector.load %arg3[%c0_41, %c2_42] : memref<8x25xf32, #tpu.memory_space<vmem>>, vector<8x1xf32>
    %137 = vector.broadcast %136 : vector<8x1xf32> to vector<8x512xf32>
    %138 = arith.mulf %135, %137 : vector<8x512xf32>
    %c0_43 = arith.constant 0 : index
    %c3 = arith.constant 3 : index
    %139 = vector.load %arg3[%c0_43, %c3] : memref<8x25xf32, #tpu.memory_space<vmem>>, vector<8x1xf32>
    %140 = vector.broadcast %139 : vector<8x1xf32> to vector<8x512xf32>
    %141 = arith.mulf %130, %140 : vector<8x512xf32>
    %142 = arith.addf %138, %141 : vector<8x512xf32>
    %c496_i32_44 = arith.constant 496 : i32
    %143 = tpu.dynamic_rotate %130 by %c496_i32_44 dim 1 : vector<8x512xf32>, i32 -> vector<8x512xf32>
    %cst_45 = arith.constant 0.000000e+00 : f32
    %144 = vector.shape_cast %90 : vector<1x512xi1> to vector<1x512xi1>
    %145 = vector.broadcast %144 : vector<1x512xi1> to vector<8x512xi1>
    %146 = vector.broadcast %cst_45 : f32 to vector<8x512xf32>
    %147 = arith.select %145, %143, %146 : vector<8x512xi1>, vector<8x512xf32>
    %c0_46 = arith.constant 0 : index
    %c4 = arith.constant 4 : index
    %148 = vector.load %arg3[%c0_46, %c4] : memref<8x25xf32, #tpu.memory_space<vmem>>, vector<8x1xf32>
    %149 = vector.broadcast %148 : vector<8x1xf32> to vector<8x512xf32>
    %150 = arith.mulf %147, %149 : vector<8x512xf32>
    %151 = arith.addf %142, %150 : vector<8x512xf32>
    %c0_47 = arith.constant 0 : index
    %c5 = arith.constant 5 : index
    %152 = vector.load %arg3[%c0_47, %c5] : memref<8x25xf32, #tpu.memory_space<vmem>>, vector<8x1xf32>
    %153 = vector.broadcast %152 : vector<8x1xf32> to vector<8x512xf32>
    %154 = arith.addf %151, %153 : vector<8x512xf32>
    %c0_48 = arith.constant 0 : index
    %c6 = arith.constant 6 : index
    %155 = vector.load %arg3[%c0_48, %c6] : memref<8x25xf32, #tpu.memory_space<vmem>>, vector<8x1xf32>
    %cst_49 = arith.constant 0.000000e+00 : f32
    %156 = vector.broadcast %cst_49 : f32 to vector<8x512xf32>
    %157 = arith.cmpf oge, %154, %156 : vector<8x512xf32>
    %158 = vector.broadcast %155 : vector<8x1xf32> to vector<8x512xf32>
    %159 = arith.mulf %158, %154 : vector<8x512xf32>
    %160 = arith.select %157, %154, %159 : vector<8x512xi1>, vector<8x512xf32>
    %c1_i32_50 = arith.constant 1 : i32
    %161 = tpu.dynamic_rotate %160 by %c1_i32_50 dim 1 : vector<8x512xf32>, i32 -> vector<8x512xf32>
    %cst_51 = arith.constant 0.000000e+00 : f32
    %162 = vector.shape_cast %30 : vector<1x512xi1> to vector<1x512xi1>
    %163 = vector.broadcast %162 : vector<1x512xi1> to vector<8x512xi1>
    %164 = vector.broadcast %cst_51 : f32 to vector<8x512xf32>
    %165 = arith.select %163, %161, %164 : vector<8x512xi1>, vector<8x512xf32>
    %c0_52 = arith.constant 0 : index
    %c7 = arith.constant 7 : index
    %166 = vector.load %arg3[%c0_52, %c7] : memref<8x25xf32, #tpu.memory_space<vmem>>, vector<8x1xf32>
    %167 = vector.broadcast %166 : vector<8x1xf32> to vector<8x512xf32>
    %168 = arith.mulf %165, %167 : vector<8x512xf32>
    %c0_53 = arith.constant 0 : index
    %c8 = arith.constant 8 : index
    %169 = vector.load %arg3[%c0_53, %c8] : memref<8x25xf32, #tpu.memory_space<vmem>>, vector<8x1xf32>
    %170 = vector.broadcast %169 : vector<8x1xf32> to vector<8x512xf32>
    %171 = arith.mulf %160, %170 : vector<8x512xf32>
    %172 = arith.addf %168, %171 : vector<8x512xf32>
    %c511_i32_54 = arith.constant 511 : i32
    %173 = tpu.dynamic_rotate %160 by %c511_i32_54 dim 1 : vector<8x512xf32>, i32 -> vector<8x512xf32>
    %cst_55 = arith.constant 0.000000e+00 : f32
    %174 = vector.shape_cast %52 : vector<1x512xi1> to vector<1x512xi1>
    %175 = vector.broadcast %174 : vector<1x512xi1> to vector<8x512xi1>
    %176 = vector.broadcast %cst_55 : f32 to vector<8x512xf32>
    %177 = arith.select %175, %173, %176 : vector<8x512xi1>, vector<8x512xf32>
    %c0_56 = arith.constant 0 : index
    %c9 = arith.constant 9 : index
    %178 = vector.load %arg3[%c0_56, %c9] : memref<8x25xf32, #tpu.memory_space<vmem>>, vector<8x1xf32>
    %179 = vector.broadcast %178 : vector<8x1xf32> to vector<8x512xf32>
    %180 = arith.mulf %177, %179 : vector<8x512xf32>
    %181 = arith.addf %172, %180 : vector<8x512xf32>
    %c0_57 = arith.constant 0 : index
    %c10 = arith.constant 10 : index
    %182 = vector.load %arg3[%c0_57, %c10] : memref<8x25xf32, #tpu.memory_space<vmem>>, vector<8x1xf32>
    %183 = vector.broadcast %182 : vector<8x1xf32> to vector<8x512xf32>
    %184 = arith.addf %181, %183 : vector<8x512xf32>
    %c0_58 = arith.constant 0 : index
    %c11 = arith.constant 11 : index
    %185 = vector.load %arg3[%c0_58, %c11] : memref<8x25xf32, #tpu.memory_space<vmem>>, vector<8x1xf32>
    %cst_59 = arith.constant 0.000000e+00 : f32
    %186 = vector.broadcast %cst_59 : f32 to vector<8x512xf32>
    %187 = arith.cmpf oge, %184, %186 : vector<8x512xf32>
    %188 = vector.broadcast %185 : vector<8x1xf32> to vector<8x512xf32>
    %189 = arith.mulf %188, %184 : vector<8x512xf32>
    %190 = arith.select %187, %184, %189 : vector<8x512xi1>, vector<8x512xf32>
    %c32_i32 = arith.constant 32 : i32
    %191 = tpu.dynamic_rotate %130 by %c32_i32 dim 1 : vector<8x512xf32>, i32 -> vector<8x512xf32>
    %c2_i32 = arith.constant 2 : i32
    %192 = vector.broadcast %c2_i32 : i32 to vector<1x512xi32>
    %193 = arith.cmpi sge, %11, %192 : vector<1x512xi32>
    %cst_60 = arith.constant 0.000000e+00 : f32
    %194 = vector.shape_cast %193 : vector<1x512xi1> to vector<1x512xi1>
    %195 = vector.broadcast %194 : vector<1x512xi1> to vector<8x512xi1>
    %196 = vector.broadcast %cst_60 : f32 to vector<8x512xf32>
    %197 = arith.select %195, %191, %196 : vector<8x512xi1>, vector<8x512xf32>
    %c0_61 = arith.constant 0 : index
    %c12 = arith.constant 12 : index
    %198 = vector.load %arg3[%c0_61, %c12] : memref<8x25xf32, #tpu.memory_space<vmem>>, vector<8x1xf32>
    %199 = vector.broadcast %198 : vector<8x1xf32> to vector<8x512xf32>
    %200 = arith.mulf %197, %199 : vector<8x512xf32>
    %c0_62 = arith.constant 0 : index
    %c13 = arith.constant 13 : index
    %201 = vector.load %arg3[%c0_62, %c13] : memref<8x25xf32, #tpu.memory_space<vmem>>, vector<8x1xf32>
    %202 = vector.broadcast %201 : vector<8x1xf32> to vector<8x512xf32>
    %203 = arith.mulf %130, %202 : vector<8x512xf32>
    %204 = arith.addf %200, %203 : vector<8x512xf32>
    %c480_i32 = arith.constant 480 : i32
    %205 = tpu.dynamic_rotate %130 by %c480_i32 dim 1 : vector<8x512xf32>, i32 -> vector<8x512xf32>
    %c14_i32 = arith.constant 14 : i32
    %206 = vector.broadcast %c14_i32 : i32 to vector<1x512xi32>
    %207 = arith.cmpi slt, %11, %206 : vector<1x512xi32>
    %cst_63 = arith.constant 0.000000e+00 : f32
    %208 = vector.shape_cast %207 : vector<1x512xi1> to vector<1x512xi1>
    %209 = vector.broadcast %208 : vector<1x512xi1> to vector<8x512xi1>
    %210 = vector.broadcast %cst_63 : f32 to vector<8x512xf32>
    %211 = arith.select %209, %205, %210 : vector<8x512xi1>, vector<8x512xf32>
    %c0_64 = arith.constant 0 : index
    %c14 = arith.constant 14 : index
    %212 = vector.load %arg3[%c0_64, %c14] : memref<8x25xf32, #tpu.memory_space<vmem>>, vector<8x1xf32>
    %213 = vector.broadcast %212 : vector<8x1xf32> to vector<8x512xf32>
    %214 = arith.mulf %211, %213 : vector<8x512xf32>
    %215 = arith.addf %204, %214 : vector<8x512xf32>
    %c0_65 = arith.constant 0 : index
    %c15 = arith.constant 15 : index
    %216 = vector.load %arg3[%c0_65, %c15] : memref<8x25xf32, #tpu.memory_space<vmem>>, vector<8x1xf32>
    %217 = vector.broadcast %216 : vector<8x1xf32> to vector<8x512xf32>
    %218 = arith.addf %215, %217 : vector<8x512xf32>
    %c0_66 = arith.constant 0 : index
    %c16 = arith.constant 16 : index
    %219 = vector.load %arg3[%c0_66, %c16] : memref<8x25xf32, #tpu.memory_space<vmem>>, vector<8x1xf32>
    %cst_67 = arith.constant 0.000000e+00 : f32
    %220 = vector.broadcast %cst_67 : f32 to vector<8x512xf32>
    %221 = arith.cmpf oge, %218, %220 : vector<8x512xf32>
    %222 = vector.broadcast %219 : vector<8x1xf32> to vector<8x512xf32>
    %223 = arith.mulf %222, %218 : vector<8x512xf32>
    %224 = arith.select %221, %218, %223 : vector<8x512xi1>, vector<8x512xf32>
    %c2_i32_68 = arith.constant 2 : i32
    %225 = tpu.dynamic_rotate %224 by %c2_i32_68 dim 1 : vector<8x512xf32>, i32 -> vector<8x512xf32>
    %c2_i32_69 = arith.constant 2 : i32
    %226 = vector.broadcast %c2_i32_69 : i32 to vector<1x512xi32>
    %227 = arith.cmpi sge, %9, %226 : vector<1x512xi32>
    %cst_70 = arith.constant 0.000000e+00 : f32
    %228 = vector.shape_cast %227 : vector<1x512xi1> to vector<1x512xi1>
    %229 = vector.broadcast %228 : vector<1x512xi1> to vector<8x512xi1>
    %230 = vector.broadcast %cst_70 : f32 to vector<8x512xf32>
    %231 = arith.select %229, %225, %230 : vector<8x512xi1>, vector<8x512xf32>
    %c0_71 = arith.constant 0 : index
    %c17 = arith.constant 17 : index
    %232 = vector.load %arg3[%c0_71, %c17] : memref<8x25xf32, #tpu.memory_space<vmem>>, vector<8x1xf32>
    %233 = vector.broadcast %232 : vector<8x1xf32> to vector<8x512xf32>
    %234 = arith.mulf %231, %233 : vector<8x512xf32>
    %c0_72 = arith.constant 0 : index
    %c18 = arith.constant 18 : index
    %235 = vector.load %arg3[%c0_72, %c18] : memref<8x25xf32, #tpu.memory_space<vmem>>, vector<8x1xf32>
    %236 = vector.broadcast %235 : vector<8x1xf32> to vector<8x512xf32>
    %237 = arith.mulf %224, %236 : vector<8x512xf32>
    %238 = arith.addf %234, %237 : vector<8x512xf32>
    %c510_i32 = arith.constant 510 : i32
    %239 = tpu.dynamic_rotate %224 by %c510_i32 dim 1 : vector<8x512xf32>, i32 -> vector<8x512xf32>
    %c14_i32_73 = arith.constant 14 : i32
    %240 = vector.broadcast %c14_i32_73 : i32 to vector<1x512xi32>
    %241 = arith.cmpi slt, %9, %240 : vector<1x512xi32>
    %cst_74 = arith.constant 0.000000e+00 : f32
    %242 = vector.shape_cast %241 : vector<1x512xi1> to vector<1x512xi1>
    %243 = vector.broadcast %242 : vector<1x512xi1> to vector<8x512xi1>
    %244 = vector.broadcast %cst_74 : f32 to vector<8x512xf32>
    %245 = arith.select %243, %239, %244 : vector<8x512xi1>, vector<8x512xf32>
    %c0_75 = arith.constant 0 : index
    %c19 = arith.constant 19 : index
    %246 = vector.load %arg3[%c0_75, %c19] : memref<8x25xf32, #tpu.memory_space<vmem>>, vector<8x1xf32>
    %247 = vector.broadcast %246 : vector<8x1xf32> to vector<8x512xf32>
    %248 = arith.mulf %245, %247 : vector<8x512xf32>
    %249 = arith.addf %238, %248 : vector<8x512xf32>
    %c0_76 = arith.constant 0 : index
    %c20 = arith.constant 20 : index
    %250 = vector.load %arg3[%c0_76, %c20] : memref<8x25xf32, #tpu.memory_space<vmem>>, vector<8x1xf32>
    %251 = vector.broadcast %250 : vector<8x1xf32> to vector<8x512xf32>
    %252 = arith.addf %249, %251 : vector<8x512xf32>
    %c0_77 = arith.constant 0 : index
    %c21 = arith.constant 21 : index
    %253 = vector.load %arg3[%c0_77, %c21] : memref<8x25xf32, #tpu.memory_space<vmem>>, vector<8x1xf32>
    %cst_78 = arith.constant 0.000000e+00 : f32
    %254 = vector.broadcast %cst_78 : f32 to vector<8x512xf32>
    %255 = arith.cmpf oge, %252, %254 : vector<8x512xf32>
    %256 = vector.broadcast %253 : vector<8x1xf32> to vector<8x512xf32>
    %257 = arith.mulf %256, %252 : vector<8x512xf32>
    %258 = arith.select %255, %252, %257 : vector<8x512xi1>, vector<8x512xf32>
    %259 = arith.addf %190, %258 : vector<8x512xf32>
    %c0_79 = arith.constant 0 : index
    %c22 = arith.constant 22 : index
    %260 = vector.load %arg3[%c0_79, %c22] : memref<8x25xf32, #tpu.memory_space<vmem>>, vector<8x1xf32>
    %261 = vector.broadcast %260 : vector<8x1xf32> to vector<8x512xf32>
    %262 = arith.mulf %259, %261 : vector<8x512xf32>
    %c0_80 = arith.constant 0 : index
    %c23 = arith.constant 23 : index
    %263 = vector.load %arg3[%c0_80, %c23] : memref<8x25xf32, #tpu.memory_space<vmem>>, vector<8x1xf32>
    %264 = vector.broadcast %263 : vector<8x1xf32> to vector<8x512xf32>
    %265 = arith.addf %262, %264 : vector<8x512xf32>
    %c0_81 = arith.constant 0 : index
    %c24 = arith.constant 24 : index
    %266 = vector.load %arg3[%c0_81, %c24] : memref<8x25xf32, #tpu.memory_space<vmem>>, vector<8x1xf32>
    %cst_82 = arith.constant 0.000000e+00 : f32
    %267 = vector.broadcast %cst_82 : f32 to vector<8x512xf32>
    %268 = arith.cmpf oge, %265, %267 : vector<8x512xf32>
    %269 = vector.broadcast %266 : vector<8x1xf32> to vector<8x512xf32>
    %270 = arith.mulf %269, %265 : vector<8x512xf32>
    %271 = arith.select %268, %265, %270 : vector<8x512xi1>, vector<8x512xf32>
    %c0_83 = arith.constant 0 : index
    %c0_84 = arith.constant 0 : index
    %272 = vector.load %arg5[%c0_83, %c0_84] : memref<16x8xf32, #tpu.memory_space<vmem>>, vector<16x8xf32>
    %273 = arith.truncf %272 : vector<16x8xf32> to vector<16x8xbf16>
    %274 = arith.truncf %271 : vector<8x512xf32> to vector<8x512xbf16>
    %cst_85 = arith.constant dense<0.000000e+00> : vector<16x512xf32>
    %275 = tpu.matmul %273, %274, %cst_85 {dimension_numbers = #tpu.dot_dimension_numbers<[1], [0], [0], [1], [0, 0, 1, 1], [], []>} : vector<16x8xbf16>, vector<8x512xbf16>, vector<16x512xf32> -> vector<16x512xf32>
    %c0_86 = arith.constant 0 : index
    %c3_87 = arith.constant 3 : index
    %276 = vector.load %arg2[%c0_86, %c3_87] : memref<16x4xf32, #tpu.memory_space<vmem>>, vector<16x1xf32>
    %277 = vector.broadcast %276 : vector<16x1xf32> to vector<16x512xf32>
    %278 = arith.addf %275, %277 : vector<16x512xf32>
    %c0_88 = arith.constant 0 : index
    %c0_89 = arith.constant 0 : index
    %279 = vector.load %arg6[%c0_88, %c0_89] : memref<16x4xf32, #tpu.memory_space<vmem>>, vector<16x4xf32>
    %c0_90 = arith.constant 0 : index
    %c0_91 = arith.constant 0 : index
    %280 = vector.load %arg7[%c0_90, %c0_91] : memref<16x4xf32, #tpu.memory_space<vmem>>, vector<16x4xf32>
    %281 = vector.extract_strided_slice %278 {offsets = [0, 0], sizes = [16, 256], strides = [1, 1]} : vector<16x512xf32> to vector<16x256xf32>
    %cst_92 = arith.constant dense<0.000000e+00> : vector<16xf32>
    %282 = vector.multi_reduction <add>, %281, %cst_92 [1] : vector<16x256xf32> to vector<16xf32>
    %283 = vector.shape_cast %282 : vector<16xf32> to vector<16x1xf32>
    %cst_93 = arith.constant 2.560000e+02 : f32
    %284 = vector.broadcast %cst_93 : f32 to vector<16x1xf32>
    %285 = arith.divf %283, %284 : vector<16x1xf32>
    %286 = vector.broadcast %285 : vector<16x1xf32> to vector<16x4xf32>
    %287 = arith.mulf %279, %286 : vector<16x4xf32>
    %cst_94 = arith.constant dense<0.000000e+00> : vector<4xf32>
    %288 = vector.multi_reduction <add>, %287, %cst_94 [0] : vector<16x4xf32> to vector<4xf32>
    %289 = vector.shape_cast %288 : vector<4xf32> to vector<1x4xf32>
    %cst_95 = arith.constant 0.000000e+00 : f32
    %290 = vector.broadcast %cst_95 : f32 to vector<1x4xf32>
    %291 = arith.maximumf %289, %290 : vector<1x4xf32>
    %292 = vector.broadcast %291 : vector<1x4xf32> to vector<16x4xf32>
    %293 = arith.mulf %280, %292 : vector<16x4xf32>
    %cst_96 = arith.constant dense<0.000000e+00> : vector<16xf32>
    %294 = vector.multi_reduction <add>, %293, %cst_96 [1] : vector<16x4xf32> to vector<16xf32>
    %295 = vector.shape_cast %294 : vector<16xf32> to vector<16x1xf32>
    %cst_97 = arith.constant 0.000000e+00 : f32
    %296 = vector.broadcast %cst_97 : f32 to vector<16x1xf32>
    %297 = arith.subf %296, %295 : vector<16x1xf32>
    %298 = math.exp %297 : vector<16x1xf32>
    %cst_98 = arith.constant 1.000000e+00 : f32
    %299 = vector.broadcast %cst_98 : f32 to vector<16x1xf32>
    %300 = arith.addf %299, %298 : vector<16x1xf32>
    %301 = tpu.reciprocal %300 {approx = true} : vector<16x1xf32> -> vector<16x1xf32>
    %302 = vector.broadcast %301 : vector<16x1xf32> to vector<16x256xf32>
    %303 = arith.mulf %281, %302 : vector<16x256xf32>
    %304 = arith.addf %303, %1 : vector<16x256xf32>
    %c0_99 = arith.constant 0 : index
    %c0_100 = arith.constant 0 : index
    %c0_101 = arith.constant 0 : index
    %305 = vector.load %arg8[%c0_99, %c0_100, %c0_101] : memref<2x16x256xf32, #tpu.memory_space<vmem>>, vector<1x16x256xf32>
    %306 = vector.shape_cast %305 : vector<1x16x256xf32> to vector<16x256xf32>
    %307 = vector.shape_cast %304 : vector<16x256xf32> to vector<1x16x256xf32>
    tpu.vector_store %arg8[%c0_99, %c0_100, %c0_101], %307 {strides = array<i32>} : memref<2x16x256xf32, #tpu.memory_space<vmem>>, vector<1x16x256xf32>,
    %308 = vector.extract_strided_slice %278 {offsets = [0, 256], sizes = [16, 256], strides = [1, 1]} : vector<16x512xf32> to vector<16x256xf32>
    %cst_102 = arith.constant dense<0.000000e+00> : vector<16xf32>
    %309 = vector.multi_reduction <add>, %308, %cst_102 [1] : vector<16x256xf32> to vector<16xf32>
    %310 = vector.shape_cast %309 : vector<16xf32> to vector<16x1xf32>
    %cst_103 = arith.constant 2.560000e+02 : f32
    %311 = vector.broadcast %cst_103 : f32 to vector<16x1xf32>
    %312 = arith.divf %310, %311 : vector<16x1xf32>
    %313 = vector.broadcast %312 : vector<16x1xf32> to vector<16x4xf32>
    %314 = arith.mulf %279, %313 : vector<16x4xf32>
    %cst_104 = arith.constant dense<0.000000e+00> : vector<4xf32>
    %315 = vector.multi_reduction <add>, %314, %cst_104 [0] : vector<16x4xf32> to vector<4xf32>
    %316 = vector.shape_cast %315 : vector<4xf32> to vector<1x4xf32>
    %cst_105 = arith.constant 0.000000e+00 : f32
    %317 = vector.broadcast %cst_105 : f32 to vector<1x4xf32>
    %318 = arith.maximumf %316, %317 : vector<1x4xf32>
    %319 = vector.broadcast %318 : vector<1x4xf32> to vector<16x4xf32>
    %320 = arith.mulf %280, %319 : vector<16x4xf32>
    %cst_106 = arith.constant dense<0.000000e+00> : vector<16xf32>
    %321 = vector.multi_reduction <add>, %320, %cst_106 [1] : vector<16x4xf32> to vector<16xf32>
    %322 = vector.shape_cast %321 : vector<16xf32> to vector<16x1xf32>
    %cst_107 = arith.constant 0.000000e+00 : f32
    %323 = vector.broadcast %cst_107 : f32 to vector<16x1xf32>
    %324 = arith.subf %323, %322 : vector<16x1xf32>
    %325 = math.exp %324 : vector<16x1xf32>
    %cst_108 = arith.constant 1.000000e+00 : f32
    %326 = vector.broadcast %cst_108 : f32 to vector<16x1xf32>
    %327 = arith.addf %326, %325 : vector<16x1xf32>
    %328 = tpu.reciprocal %327 {approx = true} : vector<16x1xf32> -> vector<16x1xf32>
    %329 = vector.broadcast %328 : vector<16x1xf32> to vector<16x256xf32>
    %330 = arith.mulf %308, %329 : vector<16x256xf32>
    %331 = arith.addf %330, %3 : vector<16x256xf32>
    %c1_109 = arith.constant 1 : index
    %c0_110 = arith.constant 0 : index
    %c0_111 = arith.constant 0 : index
    %332 = vector.load %arg8[%c1_109, %c0_110, %c0_111] : memref<2x16x256xf32, #tpu.memory_space<vmem>>, vector<1x16x256xf32>
    %333 = vector.shape_cast %332 : vector<1x16x256xf32> to vector<16x256xf32>
    %334 = vector.shape_cast %331 : vector<16x256xf32> to vector<1x16x256xf32>
    tpu.vector_store %arg8[%c1_109, %c0_110, %c0_111], %334 {strides = array<i32>} : memref<2x16x256xf32, #tpu.memory_space<vmem>>, vector<1x16x256xf32>,
    return
  }
  func.func @transform_0(%arg0: i32) -> (i32, i32, i32) {
    %c0_i32 = arith.constant 0 : i32
    %c0_i32_0 = arith.constant 0 : i32
    %c0_i32_1 = arith.constant 0 : i32
    %c0_i32_2 = arith.constant 0 : i32
    return %c0_i32, %c0_i32_0, %c0_i32_1 : i32, i32, i32
  }
  func.func @transform_1(%arg0: i32) -> (i32, i32) {
    %c0_i32 = arith.constant 0 : i32
    %c0_i32_0 = arith.constant 0 : i32
    %c0_i32_1 = arith.constant 0 : i32
    return %c0_i32, %c0_i32_0 : i32, i32
  }
  func.func @transform_2(%arg0: i32) -> (i32, i32) {
    %c0_i32 = arith.constant 0 : i32
    %c0_i32_0 = arith.constant 0 : i32
    %c0_i32_1 = arith.constant 0 : i32
    return %c0_i32, %c0_i32_0 : i32, i32
  }
  func.func @transform_3(%arg0: i32) -> (i32, i32, i32) {
    %c0_i32 = arith.constant 0 : i32
    %c0_i32_0 = arith.constant 0 : i32
    %c0_i32_1 = arith.constant 0 : i32
    %c0_i32_2 = arith.constant 0 : i32
    return %c0_i32, %c0_i32_0, %c0_i32_1 : i32, i32, i32
  }
  func.func @transform_4(%arg0: i32) -> (i32, i32) {
    %c0_i32 = arith.constant 0 : i32
    %c0_i32_0 = arith.constant 0 : i32
    %c0_i32_1 = arith.constant 0 : i32
    return %c0_i32, %c0_i32_0 : i32, i32
  }
  func.func @transform_5(%arg0: i32) -> (i32, i32) {
    %c0_i32 = arith.constant 0 : i32
    %c0_i32_0 = arith.constant 0 : i32
    %c0_i32_1 = arith.constant 0 : i32
    return %c0_i32, %c0_i32_0 : i32, i32
  }
  func.func @transform_6(%arg0: i32) -> (i32, i32) {
    %c0_i32 = arith.constant 0 : i32
    %c0_i32_0 = arith.constant 0 : i32
    %c0_i32_1 = arith.constant 0 : i32
    return %c0_i32, %c0_i32_0 : i32, i32
  }
  func.func @transform_7(%arg0: i32) -> (i32, i32, i32) {
    %c0_i32 = arith.constant 0 : i32
    %c0_i32_0 = arith.constant 0 : i32
    %c0_i32_1 = arith.constant 0 : i32
    %c0_i32_2 = arith.constant 0 : i32
    return %c0_i32, %c0_i32_0, %c0_i32_1 : i32, i32, i32
  }
}

</mosaic_0001>

<llo_original>
// kernel: tpu_custom_call.1
$region0: #{tpu_custom_call.1}
  #allocation0 [shape = 'u32[]', space=smem, size = 0x4, offset = 0x4, fixed_abs, tag = 'smem constant byte address 0x4 - core index']
  #allocation1 [shape = 'u32[72,128]{1,0:T(1,128)}', space=vmem, size = 0x9000, scoped, tag = 'internal scratch']
  %s0 = inlined_call_operand.hbm [shape: f32[2,16,256], index: 0, kind: input, shape index: {}]
  %s1 = inlined_call_operand.vmem [shape: f32[16,4], index: 1, kind: input, shape index: {}]
  %s2 = inlined_call_operand.vmem [shape: f32[8,25], index: 2, kind: input, shape index: {}]
  %s3 = inlined_call_operand.hbm [shape: f32[9,8,16], index: 3, kind: input, shape index: {}]
  %s4 = inlined_call_operand.vmem [shape: f32[16,8], index: 4, kind: input, shape index: {}]
  %s5 = inlined_call_operand.vmem [shape: f32[16,4], index: 5, kind: input, shape index: {}]
  %s6 = inlined_call_operand.vmem [shape: f32[16,4], index: 6, kind: input, shape index: {}]
  %s7 = inlined_call_operand.hbm [shape: f32[2,16,256], index: 7, kind: output, shape index: {}]
  %s8 = sld [smem:[#allocation0]]
  $region46: #{tpu_custom_call.1} parent=0
    _
  %s10 = ssub.s32 1, %s8
  %s11 = scalar_select 0, %s10, %s8
  $region1: #{tpu_custom_call.1} parent=0
    #allocation2 [shape = 'u8[32768]{0}', space=vmem, size = 0x8000, scoped, tag = 'input window, operand 0, single buffered']
    #allocation3 [shape = 's32[1]{0}', space=sflag, size = 0x4, scoped, tag = 'scoped memory for tpu_custom_call.1']
    #allocation4 [shape = 's32[1]{0}', space=sflag, size = 0x4, scoped, tag = 'scoped memory for tpu_custom_call.1']
    #allocation5 [shape = 'u8[36864]{0}', space=vmem, size = 0x9000, scoped, tag = 'input window, operand 3, single buffered']
    #allocation6 [shape = 's32[1]{0}', space=sflag, size = 0x4, scoped, tag = 'scoped memory for tpu_custom_call.1']
    #allocation7 [shape = 'u8[32768]{0}', space=vmem, size = 0x8000, scoped, tag = 'output window, operand 0, single buffered']
    %12 = vsyncpa [#allocation3], 0
    %13 = vsyncpa [#allocation6], 0
    %14 = vsyncpa [#allocation4], 0
    // Predicated region
    $region2: #{tpu_custom_call.1} parent=1 // pred_check
      _
    $region3: #{tpu_custom_call.1} parent=1 // pred_check_branch
      %16 = sbr.rel (0) target = $region5
    $region4: #{tpu_custom_call.1} parent=1 // pred_region
      %18 = vsyncadd [#allocation3], 0
      %s19 = sshll.u32 %s0, 4
      %s20 = int_to_ptr.hbm [resolvable:$true] %s19
      %s21 = sshll.u32 [#allocation2], 4
      %s22 = int_to_ptr.vmem [resolvable:$true] %s21
      %27 = dma.hbm_to_vmem [thread:$0]  %s20, 1024, %s22, [#allocation3], 256, 256, 16
    $region5: #{tpu_custom_call.1} parent=1 // pred_fallthru
      _
    // Predicated region
    $region6: #{tpu_custom_call.1} parent=1 // pred_check
      _
    $region7: #{tpu_custom_call.1} parent=1 // pred_check_branch
      %29 = sbr.rel (0) target = $region9
    $region8: #{tpu_custom_call.1} parent=1 // pred_region
      _
    $region9: #{tpu_custom_call.1} parent=1 // pred_fallthru
      _
    // Predicated region
    $region10: #{tpu_custom_call.1} parent=1 // pred_check
      _
    $region11: #{tpu_custom_call.1} parent=1 // pred_check_branch
      %31 = sbr.rel (0) target = $region13
    $region12: #{tpu_custom_call.1} parent=1 // pred_region
      _
    $region13: #{tpu_custom_call.1} parent=1 // pred_fallthru
      _
    // Predicated region
    $region14: #{tpu_custom_call.1} parent=1 // pred_check
      _
    $region15: #{tpu_custom_call.1} parent=1 // pred_check_branch
      %33 = sbr.rel (0) target = $region17
    $region16: #{tpu_custom_call.1} parent=1 // pred_region
      %35 = vsyncadd [#allocation6], 0
      %s36 = sshll.u32 %s3, 4
      %s37 = int_to_ptr.hbm [resolvable:$true] %s36
      %s38 = sshll.u32 [#allocation5], 4
      %s39 = int_to_ptr.vmem [resolvable:$true] %s38
      %44 = dma.hbm_to_vmem [thread:$0]  %s37, 1152, %s39, [#allocation6], 128, 128, 8
    $region17: #{tpu_custom_call.1} parent=1 // pred_fallthru
      _
    // Predicated region
    $region18: #{tpu_custom_call.1} parent=1 // pred_check
      _
    $region19: #{tpu_custom_call.1} parent=1 // pred_check_branch
      %46 = sbr.rel (0) target = $region21
    $region20: #{tpu_custom_call.1} parent=1 // pred_region
      _
    $region21: #{tpu_custom_call.1} parent=1 // pred_fallthru
      _
    // Predicated region
    $region22: #{tpu_custom_call.1} parent=1 // pred_check
      _
    $region23: #{tpu_custom_call.1} parent=1 // pred_check_branch
      %48 = sbr.rel (0) target = $region25
    $region24: #{tpu_custom_call.1} parent=1 // pred_region
      _
    $region25: #{tpu_custom_call.1} parent=1 // pred_fallthru
      _
    // Predicated region
    $region26: #{tpu_custom_call.1} parent=1 // pred_check
      _
    $region27: #{tpu_custom_call.1} parent=1 // pred_check_branch
      %50 = sbr.rel (0) target = $region29
    $region28: #{tpu_custom_call.1} parent=1 // pred_region
      _
    $region29: #{tpu_custom_call.1} parent=1 // pred_fallthru
      _
    // Predicated region
    $region30: #{tpu_custom_call.1} parent=1 // pred_check
      _
    $region31: #{tpu_custom_call.1} parent=1 // pred_check_branch
      %52 = sbr.rel (0) target = $region33
    $region32: #{tpu_custom_call.1} parent=1 // pred_region
      %54 = dma.done [#allocation3], 1024
    $region33: #{tpu_custom_call.1} parent=1 // pred_fallthru
      _
    // Predicated region
    $region34: #{tpu_custom_call.1} parent=1 // pred_check
      _
    $region35: #{tpu_custom_call.1} parent=1 // pred_check_branch
      %56 = sbr.rel (0) target = $region37
    $region36: #{tpu_custom_call.1} parent=1 // pred_region
      %58 = dma.done [#allocation6], 1152
    $region37: #{tpu_custom_call.1} parent=1 // pred_fallthru
      _
    %v60 = vld [vmem:[#allocation2] sm:$0xff]
    %v61 = vld [vmem:[#allocation2 + $0x8] sm:$0xff]
    %v62 = vld [vmem:[#allocation2 + $0x10] sm:$0xff]
    %v63 = vld [vmem:[#allocation2 + $0x18] sm:$0xff]
    %s64 = scalar_lea.vmem [#allocation2], 32
    %v65 = vld [vmem:[%s64] sm:$0xff]
    %v66 = vld [vmem:[%s64 + $0x8] sm:$0xff]
    %v67 = vld [vmem:[%s64 + $0x10] sm:$0xff]
    %v68 = vld [vmem:[%s64 + $0x18] sm:$0xff]
    %v69 = vlaneseq
    %v70 = vand.u32 %v69, 127
    %v71 = vadd.s32 %v70, 128
    %v72 = vadd.s32 %v70, 256
    %v73 = vadd.s32 %v70, 384
    %v74 = vand.u32 %v70, 255
    %v75 = vand.u32 %v71, 255
    %v76 = vand.u32 %v72, 255
    %v77 = vand.u32 %v73, 255
    %v78 = vand.u32 %v74, 15
    %v79 = vand.u32 %v75, 15
    %v80 = vand.u32 %v76, 15
    %v81 = vand.u32 %v77, 15
    %v82 = vshra.s32 %v74, 4
    %v83 = vshra.s32 %v75, 4
    %v84 = vshra.s32 %v76, 4
    %v85 = vshra.s32 %v77, 4
    %v86 = vld [vmem:[%s1] sm:$0xff]
    %v87 = vld [vmem:[%s1 + $0x8] sm:$0xff]
    %89 = vset.pattern.permute.xlu0 0
    %90 = vperm.xlu0 %89, %v86
    %v91 = vpop.permute.xlu0 %90
    %94 = vset.pattern.permute.xlu0 0
    %95 = vperm.xlu0 %94, %v87
    %v96 = vpop.permute.xlu0 %95
    %v98 = vmul.f32 %v60, %v91
    %v99 = vmul.f32 %v61, %v91
    %v100 = vmul.f32 %v65, %v91
    %v101 = vmul.f32 %v66, %v91
    %v102 = vmul.f32 %v62, %v96
    %v103 = vmul.f32 %v63, %v96
    %v104 = vmul.f32 %v67, %v96
    %v105 = vmul.f32 %v68, %v96
    %106 = vset.pattern.permute.xlu0 1
    %107 = vperm.xlu0 %106, %v86
    %v108 = vpop.permute.xlu0 %107
    %110 = vset.pattern.permute.xlu0 1
    %111 = vperm.xlu0 %110, %v87
    %v112 = vpop.permute.xlu0 %111
    %v114 = vadd.f32 %v98, %v108
    %v115 = vadd.f32 %v99, %v108
    %v116 = vadd.f32 %v100, %v108
    %v117 = vadd.f32 %v101, %v108
    %v118 = vadd.f32 %v102, %v112
    %v119 = vadd.f32 %v103, %v112
    %v120 = vadd.f32 %v104, %v112
    %v121 = vadd.f32 %v105, %v112
    %vm122 = vcmp.ge.f32.partialorder %v114, 0.0
    %vm123 = vcmp.ge.f32.partialorder %v115, 0.0
    %vm124 = vcmp.ge.f32.partialorder %v116, 0.0
    %vm125 = vcmp.ge.f32.partialorder %v117, 0.0
    %vm126 = vcmp.ge.f32.partialorder %v118, 0.0
    %vm127 = vcmp.ge.f32.partialorder %v119, 0.0
    %vm128 = vcmp.ge.f32.partialorder %v120, 0.0
    %vm129 = vcmp.ge.f32.partialorder %v121, 0.0
    %130 = vset.pattern.permute.xlu0 2
    %131 = vperm.xlu0 %130, %v86
    %v132 = vpop.permute.xlu0 %131
    %134 = vset.pattern.permute.xlu0 2
    %135 = vperm.xlu0 %134, %v87
    %v136 = vpop.permute.xlu0 %135
    %v138 = vmul.f32 %v132, %v114
    %v139 = vmul.f32 %v132, %v115
    %v140 = vmul.f32 %v132, %v116
    %v141 = vmul.f32 %v132, %v117
    %v142 = vmul.f32 %v136, %v118
    %v143 = vmul.f32 %v136, %v119
    %v144 = vmul.f32 %v136, %v120
    %v145 = vmul.f32 %v136, %v121
    %v146 = vsel %vm122, %v114, %v138
    %v147 = vsel %vm123, %v115, %v139
    %v148 = vsel %vm124, %v116, %v140
    %v149 = vsel %vm125, %v117, %v141
    %v150 = vsel %vm126, %v118, %v142
    %v151 = vsel %vm127, %v119, %v143
    %v152 = vsel %vm128, %v120, %v144
    %v153 = vsel %vm129, %v121, %v145
    %v154 = vld [vmem:[#allocation5] sm:$0xff]
    %v155 = vld [vmem:[#allocation5 + $0x8] sm:$0xff]
    %v156 = vld [vmem:[#allocation5 + $0x10] sm:$0xff]
    %v157 = vld [vmem:[#allocation5 + $0x18] sm:$0xff]
    %v158 = vld [vmem:[#allocation5 + $0x20] sm:$0xff]
    %v159 = vld [vmem:[#allocation5 + $0x28] sm:$0xff]
    %v160 = vld [vmem:[#allocation5 + $0x30] sm:$0xff]
    %v161 = vld [vmem:[#allocation5 + $0x38] sm:$0xff]
    %v162 = vld [vmem:[#allocation5 + $0x40] sm:$0xff]
    %v163 = vpack.c.bf16 %v154, %v154
    %v164 = vpack.c.bf16 %v155, %v155
    %v165 = vpack.c.bf16 %v156, %v156
    %v166 = vpack.c.bf16 %v157, %v157
    %v167 = vpack.c.bf16 %v158, %v158
    %v168 = vpack.c.bf16 %v159, %v159
    %v169 = vpack.c.bf16 %v160, %v160
    %v170 = vpack.c.bf16 %v161, %v161
    %v171 = vpack.c.bf16 %v162, %v162
    %172 = vrot.lane.b32.xlu0 %v146, 17
    %v173 = vpop.permute.xlu0 %172
    %174 = vrot.lane.b32.xlu0 %v150, 17
    %v175 = vpop.permute.xlu0 %174
    %176 = vrot.lane.b32.xlu0 %v147, 17
    %v177 = vpop.permute.xlu0 %176
    %178 = vrot.lane.b32.xlu0 %v151, 17
    %v179 = vpop.permute.xlu0 %178
    %180 = vrot.lane.b32.xlu0 %v148, 17
    %v181 = vpop.permute.xlu0 %180
    %182 = vrot.lane.b32.xlu0 %v152, 17
    %v183 = vpop.permute.xlu0 %182
    %184 = vrot.lane.b32.xlu0 %v149, 17
    %v185 = vpop.permute.xlu0 %184
    %186 = vrot.lane.b32.xlu0 %v153, 17
    %v187 = vpop.permute.xlu0 %186
    %vm188 = vcmp.lt.s32.totalorder %v70, 17
    %v189 = vsel %vm188, %v181, %v185
    %v190 = vsel %vm188, %v183, %v187
    %v191 = vsel %vm188, %v177, %v181
    %v192 = vsel %vm188, %v179, %v183
    %v193 = vsel %vm188, %v173, %v177
    %v194 = vsel %vm188, %v175, %v179
    %v195 = vsel %vm188, %v185, %v173
    %v196 = vsel %vm188, %v187, %v175
    %vm197 = vcmp.ge.s32.totalorder %v82, 1
    %vm198 = vcmp.ge.s32.totalorder %v83, 1
    %vm199 = vcmp.ge.s32.totalorder %v84, 1
    %vm200 = vcmp.ge.s32.totalorder %v85, 1
    %vm201 = vcmp.ge.s32.totalorder %v78, 1
    %vm202 = vcmp.ge.s32.totalorder %v79, 1
    %vm203 = vcmp.ge.s32.totalorder %v80, 1
    %vm204 = vcmp.ge.s32.totalorder %v81, 1
    %vm205 = vmand %vm197, %vm201
    %vm206 = vmand %vm198, %vm202
    %vm207 = vmand %vm199, %vm203
    %vm208 = vmand %vm200, %vm204
    %v209 = vsel %vm205, 1, 0
    %v210 = vsel %vm206, 1, 0
    %v211 = vsel %vm207, 1, 0
    %v212 = vsel %vm208, 1, 0
    %vm213 = vcmp.eq.s32.totalorder %v209, 1
    %vm214 = vcmp.eq.s32.totalorder %v210, 1
    %vm215 = vcmp.eq.s32.totalorder %v211, 1
    %vm216 = vcmp.eq.s32.totalorder %v212, 1
    %v217 = vsel %vm213, %v195, 0.0
    %v218 = vsel %vm214, %v193, 0.0
    %v219 = vsel %vm215, %v191, 0.0
    %v220 = vsel %vm216, %v189, 0.0
    %v221 = vsel %vm213, %v196, 0.0
    %v222 = vsel %vm214, %v194, 0.0
    %v223 = vsel %vm215, %v192, 0.0
    %v224 = vsel %vm216, %v190, 0.0
    %v225 = vpack.c.bf16 %v221, %v217
    %v226 = vpack.c.bf16 %v222, %v218
    %v227 = vpack.c.bf16 %v223, %v219
    %v228 = vpack.c.bf16 %v224, %v220
    %229 = vrot.lane.b32.xlu0 %v146, 16
    %v230 = vpop.permute.xlu0 %229
    %231 = vrot.lane.b32.xlu0 %v150, 16
    %v232 = vpop.permute.xlu0 %231
    %233 = vrot.lane.b32.xlu0 %v147, 16
    %v234 = vpop.permute.xlu0 %233
    %235 = vrot.lane.b32.xlu0 %v151, 16
    %v236 = vpop.permute.xlu0 %235
    %237 = vrot.lane.b32.xlu0 %v148, 16
    %v238 = vpop.permute.xlu0 %237
    %239 = vrot.lane.b32.xlu0 %v152, 16
    %v240 = vpop.permute.xlu0 %239
    %241 = vrot.lane.b32.xlu0 %v149, 16
    %v242 = vpop.permute.xlu0 %241
    %243 = vrot.lane.b32.xlu0 %v153, 16
    %v244 = vpop.permute.xlu0 %243
    %vm245 = vcmp.lt.s32.totalorder %v70, 16
    %v246 = vsel %vm245, %v238, %v242
    %v247 = vsel %vm245, %v240, %v244
    %v248 = vsel %vm245, %v234, %v238
    %v249 = vsel %vm245, %v236, %v240
    %v250 = vsel %vm245, %v230, %v234
    %v251 = vsel %vm245, %v232, %v236
    %v252 = vsel %vm245, %v242, %v230
    %v253 = vsel %vm245, %v244, %v232
    %v254 = vsel %vm197, 1, 0
    %v255 = vsel %vm198, 1, 0
    %v256 = vsel %vm199, 1, 0
    %v257 = vsel %vm200, 1, 0
    %vm258 = vcmp.eq.s32.totalorder %v254, 1
    %vm259 = vcmp.eq.s32.totalorder %v255, 1
    %vm260 = vcmp.eq.s32.totalorder %v256, 1
    %vm261 = vcmp.eq.s32.totalorder %v257, 1
    %v262 = vsel %vm258, %v252, 0.0
    %v263 = vsel %vm259, %v250, 0.0
    %v264 = vsel %vm260, %v248, 0.0
    %v265 = vsel %vm261, %v246, 0.0
    %v266 = vsel %vm258, %v253, 0.0
    %v267 = vsel %vm259, %v251, 0.0
    %v268 = vsel %vm260, %v249, 0.0
    %v269 = vsel %vm261, %v247, 0.0
    %v270 = vpack.c.bf16 %v266, %v262
    %v271 = vpack.c.bf16 %v267, %v263
    %v272 = vpack.c.bf16 %v268, %v264
    %v273 = vpack.c.bf16 %v269, %v265
    %vm274 = vcmask 130048
    %v276 = vsel %vm274, %v164, 0
    %278 = vmatpush.bf16.msra.mxu0 0
    %279 = vmatpush.bf16.msra.mxu0 0
    %280 = vmatpush.bf16.msra.mxu0 0
    %281 = vmatpush.bf16.msra.mxu0 0
    %282 = vmatpush.bf16.msra.mxu0 0
    %283 = vmatpush.bf16.msra.mxu0 0
    %284 = vmatpush.bf16.msra.mxu0 0
    %285 = vmatpush.bf16.msra.mxu0 %v270
    %286 = vmatmul.bf16.gmra.mxu0 %v276
    %v287 = vpop.f32.mrf.mxu0
    %v288 = vadd.f32 0.0, %v287
    %v289 = vpop.f32.mrf.mxu0
    %290 = vdwg.mxu0
    %291 = vmatpush.bf16.msra.mxu0 0
    %292 = vmatpush.bf16.msra.mxu0 0
    %293 = vmatpush.bf16.msra.mxu0 0
    %294 = vmatpush.bf16.msra.mxu0 0
    %295 = vmatpush.bf16.msra.mxu0 0
    %296 = vmatpush.bf16.msra.mxu0 0
    %297 = vmatpush.bf16.msra.mxu0 0
    %298 = vmatpush.bf16.msra.mxu0 %v271
    %299 = vmatmul.bf16.gmra.mxu0 %v276
    %v300 = vpop.f32.mrf.mxu0
    %v301 = vadd.f32 0.0, %v300
    %v302 = vpop.f32.mrf.mxu0
    %303 = vdwg.mxu0
    %304 = vmatpush.bf16.msra.mxu0 0
    %305 = vmatpush.bf16.msra.mxu0 0
    %306 = vmatpush.bf16.msra.mxu0 0
    %307 = vmatpush.bf16.msra.mxu0 0
    %308 = vmatpush.bf16.msra.mxu0 0
    %309 = vmatpush.bf16.msra.mxu0 0
    %310 = vmatpush.bf16.msra.mxu0 0
    %311 = vmatpush.bf16.msra.mxu0 %v272
    %312 = vmatmul.bf16.gmra.mxu0 %v276
    %v313 = vpop.f32.mrf.mxu0
    %v314 = vadd.f32 0.0, %v313
    %v315 = vpop.f32.mrf.mxu0
    %316 = vdwg.mxu0
    %317 = vmatpush.bf16.msra.mxu0 0
    %318 = vmatpush.bf16.msra.mxu0 0
    %319 = vmatpush.bf16.msra.mxu0 0
    %320 = vmatpush.bf16.msra.mxu0 0
    %321 = vmatpush.bf16.msra.mxu0 0
    %322 = vmatpush.bf16.msra.mxu0 0
    %323 = vmatpush.bf16.msra.mxu0 0
    %324 = vmatpush.bf16.msra.mxu0 %v273
    %325 = vmatmul.bf16.gmra.mxu0 %v276
    %v326 = vpop.f32.mrf.mxu0
    %v327 = vadd.f32 0.0, %v326
    %v328 = vpop.f32.mrf.mxu0
    %329 = vdwg.mxu0
    %v331 = vsel %vm274, %v163, 0
    %333 = vmatpush.bf16.msra.mxu0 0
    %334 = vmatpush.bf16.msra.mxu0 0
    %335 = vmatpush.bf16.msra.mxu0 0
    %336 = vmatpush.bf16.msra.mxu0 0
    %337 = vmatpush.bf16.msra.mxu0 0
    %338 = vmatpush.bf16.msra.mxu0 0
    %339 = vmatpush.bf16.msra.mxu0 0
    %340 = vmatpush.bf16.msra.mxu0 %v225
    %341 = vmatmul.bf16.gmra.mxu0 %v331
    %v342 = vpop.f32.mrf.mxu0
    %v343 = vadd.f32 %v288, %v342
    %v344 = vpop.f32.mrf.mxu0
    %345 = vdwg.mxu0
    %346 = vmatpush.bf16.msra.mxu0 0
    %347 = vmatpush.bf16.msra.mxu0 0
    %348 = vmatpush.bf16.msra.mxu0 0
    %349 = vmatpush.bf16.msra.mxu0 0
    %350 = vmatpush.bf16.msra.mxu0 0
    %351 = vmatpush.bf16.msra.mxu0 0
    %352 = vmatpush.bf16.msra.mxu0 0
    %353 = vmatpush.bf16.msra.mxu0 %v226
    %354 = vmatmul.bf16.gmra.mxu0 %v331
    %v355 = vpop.f32.mrf.mxu0
    %v356 = vadd.f32 %v301, %v355
    %v357 = vpop.f32.mrf.mxu0
    %358 = vdwg.mxu0
    %359 = vmatpush.bf16.msra.mxu0 0
    %360 = vmatpush.bf16.msra.mxu0 0
    %361 = vmatpush.bf16.msra.mxu0 0
    %362 = vmatpush.bf16.msra.mxu0 0
    %363 = vmatpush.bf16.msra.mxu0 0
    %364 = vmatpush.bf16.msra.mxu0 0
    %365 = vmatpush.bf16.msra.mxu0 0
    %366 = vmatpush.bf16.msra.mxu0 %v227
    %367 = vmatmul.bf16.gmra.mxu0 %v331
    %v368 = vpop.f32.mrf.mxu0
    %v369 = vadd.f32 %v314, %v368
    %v370 = vpop.f32.mrf.mxu0
    %371 = vdwg.mxu0
    %372 = vmatpush.bf16.msra.mxu0 0
    %373 = vmatpush.bf16.msra.mxu0 0
    %374 = vmatpush.bf16.msra.mxu0 0
    %375 = vmatpush.bf16.msra.mxu0 0
    %376 = vmatpush.bf16.msra.mxu0 0
    %377 = vmatpush.bf16.msra.mxu0 0
    %378 = vmatpush.bf16.msra.mxu0 0
    %379 = vmatpush.bf16.msra.mxu0 %v228
    %380 = vmatmul.bf16.gmra.mxu0 %v331
    %v381 = vpop.f32.mrf.mxu0
    %v382 = vadd.f32 %v327, %v381
    %v383 = vpop.f32.mrf.mxu0
    %384 = vdwg.mxu0
    %385 = vrot.lane.b32.xlu0 %v146, 15
    %v386 = vpop.permute.xlu0 %385
    %387 = vrot.lane.b32.xlu0 %v150, 15
    %v388 = vpop.permute.xlu0 %387
    %389 = vrot.lane.b32.xlu0 %v147, 15
    %v390 = vpop.permute.xlu0 %389
    %391 = vrot.lane.b32.xlu0 %v151, 15
    %v392 = vpop.permute.xlu0 %391
    %393 = vrot.lane.b32.xlu0 %v148, 15
    %v394 = vpop.permute.xlu0 %393
    %395 = vrot.lane.b32.xlu0 %v152, 15
    %v396 = vpop.permute.xlu0 %395
    %397 = vrot.lane.b32.xlu0 %v149, 15
    %v398 = vpop.permute.xlu0 %397
    %399 = vrot.lane.b32.xlu0 %v153, 15
    %v400 = vpop.permute.xlu0 %399
    %vm401 = vcmp.lt.s32.totalorder %v70, 15
    %v402 = vsel %vm401, %v394, %v398
    %v403 = vsel %vm401, %v396, %v400
    %v404 = vsel %vm401, %v390, %v394
    %v405 = vsel %vm401, %v392, %v396
    %v406 = vsel %vm401, %v386, %v390
    %v407 = vsel %vm401, %v388, %v392
    %v408 = vsel %vm401, %v398, %v386
    %v409 = vsel %vm401, %v400, %v388
    %vm410 = vcmp.lt.s32.totalorder %v78, 15
    %vm411 = vcmp.lt.s32.totalorder %v79, 15
    %vm412 = vcmp.lt.s32.totalorder %v80, 15
    %vm413 = vcmp.lt.s32.totalorder %v81, 15
    %vm414 = vmand %vm197, %vm410
    %vm415 = vmand %vm198, %vm411
    %vm416 = vmand %vm199, %vm412
    %vm417 = vmand %vm200, %vm413
    %v418 = vsel %vm414, 1, 0
    %v419 = vsel %vm415, 1, 0
    %v420 = vsel %vm416, 1, 0
    %v421 = vsel %vm417, 1, 0
    %vm422 = vcmp.eq.s32.totalorder %v418, 1
    %vm423 = vcmp.eq.s32.totalorder %v419, 1
    %vm424 = vcmp.eq.s32.totalorder %v420, 1
    %vm425 = vcmp.eq.s32.totalorder %v421, 1
    %v426 = vsel %vm422, %v408, 0.0
    %v427 = vsel %vm423, %v406, 0.0
    %v428 = vsel %vm424, %v404, 0.0
    %v429 = vsel %vm425, %v402, 0.0
    %v430 = vsel %vm422, %v409, 0.0
    %v431 = vsel %vm423, %v407, 0.0
    %v432 = vsel %vm424, %v405, 0.0
    %v433 = vsel %vm425, %v403, 0.0
    %v434 = vpack.c.bf16 %v430, %v426
    %v435 = vpack.c.bf16 %v431, %v427
    %v436 = vpack.c.bf16 %v432, %v428
    %v437 = vpack.c.bf16 %v433, %v429
    %v439 = vsel %vm274, %v165, 0
    %441 = vmatpush.bf16.msra.mxu0 0
    %442 = vmatpush.bf16.msra.mxu0 0
    %443 = vmatpush.bf16.msra.mxu0 0
    %444 = vmatpush.bf16.msra.mxu0 0
    %445 = vmatpush.bf16.msra.mxu0 0
    %446 = vmatpush.bf16.msra.mxu0 0
    %447 = vmatpush.bf16.msra.mxu0 0
    %448 = vmatpush.bf16.msra.mxu0 %v434
    %449 = vmatmul.bf16.gmra.mxu0 %v439
    %v450 = vpop.f32.mrf.mxu0
    %v451 = vadd.f32 0.0, %v450
    %v452 = vpop.f32.mrf.mxu0
    %453 = vdwg.mxu0
    %454 = vmatpush.bf16.msra.mxu0 0
    %455 = vmatpush.bf16.msra.mxu0 0
    %456 = vmatpush.bf16.msra.mxu0 0
    %457 = vmatpush.bf16.msra.mxu0 0
    %458 = vmatpush.bf16.msra.mxu0 0
    %459 = vmatpush.bf16.msra.mxu0 0
    %460 = vmatpush.bf16.msra.mxu0 0
    %461 = vmatpush.bf16.msra.mxu0 %v435
    %462 = vmatmul.bf16.gmra.mxu0 %v439
    %v463 = vpop.f32.mrf.mxu0
    %v464 = vadd.f32 0.0, %v463
    %v465 = vpop.f32.mrf.mxu0
    %466 = vdwg.mxu0
    %467 = vmatpush.bf16.msra.mxu0 0
    %468 = vmatpush.bf16.msra.mxu0 0
    %469 = vmatpush.bf16.msra.mxu0 0
    %470 = vmatpush.bf16.msra.mxu0 0
    %471 = vmatpush.bf16.msra.mxu0 0
    %472 = vmatpush.bf16.msra.mxu0 0
    %473 = vmatpush.bf16.msra.mxu0 0
    %474 = vmatpush.bf16.msra.mxu0 %v436
    %475 = vmatmul.bf16.gmra.mxu0 %v439
    %v476 = vpop.f32.mrf.mxu0
    %v477 = vadd.f32 0.0, %v476
    %v478 = vpop.f32.mrf.mxu0
    %479 = vdwg.mxu0
    %480 = vmatpush.bf16.msra.mxu0 0
    %481 = vmatpush.bf16.msra.mxu0 0
    %482 = vmatpush.bf16.msra.mxu0 0
    %483 = vmatpush.bf16.msra.mxu0 0
    %484 = vmatpush.bf16.msra.mxu0 0
    %485 = vmatpush.bf16.msra.mxu0 0
    %486 = vmatpush.bf16.msra.mxu0 0
    %487 = vmatpush.bf16.msra.mxu0 %v437
    %488 = vmatmul.bf16.gmra.mxu0 %v439
    %v489 = vpop.f32.mrf.mxu0
    %v490 = vadd.f32 0.0, %v489
    %v491 = vpop.f32.mrf.mxu0
    %492 = vdwg.mxu0
    %v493 = vadd.f32 %v343, %v451
    %v494 = vadd.f32 %v356, %v464
    %v495 = vadd.f32 %v369, %v477
    %v496 = vadd.f32 %v382, %v490
    %497 = vrot.lane.b32.xlu0 %v146, 1
    %v498 = vpop.permute.xlu0 %497
    %499 = vrot.lane.b32.xlu0 %v150, 1
    %v500 = vpop.permute.xlu0 %499
    %501 = vrot.lane.b32.xlu0 %v147, 1
    %v502 = vpop.permute.xlu0 %501
    %503 = vrot.lane.b32.xlu0 %v151, 1
    %v504 = vpop.permute.xlu0 %503
    %505 = vrot.lane.b32.xlu0 %v148, 1
    %v506 = vpop.permute.xlu0 %505
    %507 = vrot.lane.b32.xlu0 %v152, 1
    %v508 = vpop.permute.xlu0 %507
    %509 = vrot.lane.b32.xlu0 %v149, 1
    %v510 = vpop.permute.xlu0 %509
    %511 = vrot.lane.b32.xlu0 %v153, 1
    %v512 = vpop.permute.xlu0 %511
    %vm513 = vcmp.lt.s32.totalorder %v70, 1
    %v514 = vsel %vm513, %v506, %v510
    %v515 = vsel %vm513, %v508, %v512
    %v516 = vsel %vm513, %v502, %v506
    %v517 = vsel %vm513, %v504, %v508
    %v518 = vsel %vm513, %v498, %v502
    %v519 = vsel %vm513, %v500, %v504
    %v520 = vsel %vm513, %v510, %v498
    %v521 = vsel %vm513, %v512, %v500
    %v522 = vsel %vm201, 1, 0
    %v523 = vsel %vm202, 1, 0
    %v524 = vsel %vm203, 1, 0
    %v525 = vsel %vm204, 1, 0
    %vm526 = vcmp.eq.s32.totalorder %v522, 1
    %vm527 = vcmp.eq.s32.totalorder %v523, 1
    %vm528 = vcmp.eq.s32.totalorder %v524, 1
    %vm529 = vcmp.eq.s32.totalorder %v525, 1
    %v530 = vsel %vm526, %v520, 0.0
    %v531 = vsel %vm527, %v518, 0.0
    %v532 = vsel %vm528, %v516, 0.0
    %v533 = vsel %vm529, %v514, 0.0
    %v534 = vsel %vm526, %v521, 0.0
    %v535 = vsel %vm527, %v519, 0.0
    %v536 = vsel %vm528, %v517, 0.0
    %v537 = vsel %vm529, %v515, 0.0
    %v538 = vpack.c.bf16 %v534, %v530
    %v539 = vpack.c.bf16 %v535, %v531
    %v540 = vpack.c.bf16 %v536, %v532
    %v541 = vpack.c.bf16 %v537, %v533
    %v543 = vsel %vm274, %v166, 0
    %545 = vmatpush.bf16.msra.mxu0 0
    %546 = vmatpush.bf16.msra.mxu0 0
    %547 = vmatpush.bf16.msra.mxu0 0
    %548 = vmatpush.bf16.msra.mxu0 0
    %549 = vmatpush.bf16.msra.mxu0 0
    %550 = vmatpush.bf16.msra.mxu0 0
    %551 = vmatpush.bf16.msra.mxu0 0
    %552 = vmatpush.bf16.msra.mxu0 %v538
    %553 = vmatmul.bf16.gmra.mxu0 %v543
    %v554 = vpop.f32.mrf.mxu0
    %v555 = vadd.f32 0.0, %v554
    %v556 = vpop.f32.mrf.mxu0
    %557 = vdwg.mxu0
    %558 = vmatpush.bf16.msra.mxu0 0
    %559 = vmatpush.bf16.msra.mxu0 0
    %560 = vmatpush.bf16.msra.mxu0 0
    %561 = vmatpush.bf16.msra.mxu0 0
    %562 = vmatpush.bf16.msra.mxu0 0
    %563 = vmatpush.bf16.msra.mxu0 0
    %564 = vmatpush.bf16.msra.mxu0 0
    %565 = vmatpush.bf16.msra.mxu0 %v539
    %566 = vmatmul.bf16.gmra.mxu0 %v543
    %v567 = vpop.f32.mrf.mxu0
    %v568 = vadd.f32 0.0, %v567
    %v569 = vpop.f32.mrf.mxu0
    %570 = vdwg.mxu0
    %571 = vmatpush.bf16.msra.mxu0 0
    %572 = vmatpush.bf16.msra.mxu0 0
    %573 = vmatpush.bf16.msra.mxu0 0
    %574 = vmatpush.bf16.msra.mxu0 0
    %575 = vmatpush.bf16.msra.mxu0 0
    %576 = vmatpush.bf16.msra.mxu0 0
    %577 = vmatpush.bf16.msra.mxu0 0
    %578 = vmatpush.bf16.msra.mxu0 %v540
    %579 = vmatmul.bf16.gmra.mxu0 %v543
    %v580 = vpop.f32.mrf.mxu0
    %v581 = vadd.f32 0.0, %v580
    %v582 = vpop.f32.mrf.mxu0
    %583 = vdwg.mxu0
    %584 = vmatpush.bf16.msra.mxu0 0
    %585 = vmatpush.bf16.msra.mxu0 0
    %586 = vmatpush.bf16.msra.mxu0 0
    %587 = vmatpush.bf16.msra.mxu0 0
    %588 = vmatpush.bf16.msra.mxu0 0
    %589 = vmatpush.bf16.msra.mxu0 0
    %590 = vmatpush.bf16.msra.mxu0 0
    %591 = vmatpush.bf16.msra.mxu0 %v541
    %592 = vmatmul.bf16.gmra.mxu0 %v543
    %v593 = vpop.f32.mrf.mxu0
    %v594 = vadd.f32 0.0, %v593
    %v595 = vpop.f32.mrf.mxu0
    %596 = vdwg.mxu0
    %v597 = vadd.f32 %v493, %v555
    %v598 = vadd.f32 %v494, %v568
    %v599 = vadd.f32 %v495, %v581
    %v600 = vadd.f32 %v496, %v594
    %v601 = vpack.c.bf16 %v150, %v146
    %v602 = vpack.c.bf16 %v151, %v147
    %v603 = vpack.c.bf16 %v152, %v148
    %v604 = vpack.c.bf16 %v153, %v149
    %v606 = vsel %vm274, %v167, 0
    %608 = vmatpush.bf16.msra.mxu0 0
    %609 = vmatpush.bf16.msra.mxu0 0
    %610 = vmatpush.bf16.msra.mxu0 0
    %611 = vmatpush.bf16.msra.mxu0 0
    %612 = vmatpush.bf16.msra.mxu0 0
    %613 = vmatpush.bf16.msra.mxu0 0
    %614 = vmatpush.bf16.msra.mxu0 0
    %615 = vmatpush.bf16.msra.mxu0 %v601
    %616 = vmatmul.bf16.gmra.mxu0 %v606
    %v617 = vpop.f32.mrf.mxu0
    %v618 = vadd.f32 0.0, %v617
    %v619 = vpop.f32.mrf.mxu0
    %620 = vdwg.mxu0
    %621 = vmatpush.bf16.msra.mxu0 0
    %622 = vmatpush.bf16.msra.mxu0 0
    %623 = vmatpush.bf16.msra.mxu0 0
    %624 = vmatpush.bf16.msra.mxu0 0
    %625 = vmatpush.bf16.msra.mxu0 0
    %626 = vmatpush.bf16.msra.mxu0 0
    %627 = vmatpush.bf16.msra.mxu0 0
    %628 = vmatpush.bf16.msra.mxu0 %v602
    %629 = vmatmul.bf16.gmra.mxu0 %v606
    %v630 = vpop.f32.mrf.mxu0
    %v631 = vadd.f32 0.0, %v630
    %v632 = vpop.f32.mrf.mxu0
    %633 = vdwg.mxu0
    %634 = vmatpush.bf16.msra.mxu0 0
    %635 = vmatpush.bf16.msra.mxu0 0
    %636 = vmatpush.bf16.msra.mxu0 0
    %637 = vmatpush.bf16.msra.mxu0 0
    %638 = vmatpush.bf16.msra.mxu0 0
    %639 = vmatpush.bf16.msra.mxu0 0
    %640 = vmatpush.bf16.msra.mxu0 0
    %641 = vmatpush.bf16.msra.mxu0 %v603
    %642 = vmatmul.bf16.gmra.mxu0 %v606
    %v643 = vpop.f32.mrf.mxu0
    %v644 = vadd.f32 0.0, %v643
    %v645 = vpop.f32.mrf.mxu0
    %646 = vdwg.mxu0
    %647 = vmatpush.bf16.msra.mxu0 0
    %648 = vmatpush.bf16.msra.mxu0 0
    %649 = vmatpush.bf16.msra.mxu0 0
    %650 = vmatpush.bf16.msra.mxu0 0
    %651 = vmatpush.bf16.msra.mxu0 0
    %652 = vmatpush.bf16.msra.mxu0 0
    %653 = vmatpush.bf16.msra.mxu0 0
    %654 = vmatpush.bf16.msra.mxu0 %v604
    %655 = vmatmul.bf16.gmra.mxu0 %v606
    %v656 = vpop.f32.mrf.mxu0
    %v657 = vadd.f32 0.0, %v656
    %v658 = vpop.f32.mrf.mxu0
    %659 = vdwg.mxu0
    %v660 = vadd.f32 %v597, %v618
    %v661 = vadd.f32 %v598, %v631
    %v662 = vadd.f32 %v599, %v644
    %v663 = vadd.f32 %v600, %v657
    %664 = vrot.lane.b32.xlu0 %v146, 127
    %v665 = vpop.permute.xlu0 %664
    %666 = vrot.lane.b32.xlu0 %v150, 127
    %v667 = vpop.permute.xlu0 %666
    %668 = vrot.lane.b32.xlu0 %v147, 127
    %v669 = vpop.permute.xlu0 %668
    %670 = vrot.lane.b32.xlu0 %v151, 127
    %v671 = vpop.permute.xlu0 %670
    %672 = vrot.lane.b32.xlu0 %v148, 127
    %v673 = vpop.permute.xlu0 %672
    %674 = vrot.lane.b32.xlu0 %v152, 127
    %v675 = vpop.permute.xlu0 %674
    %676 = vrot.lane.b32.xlu0 %v149, 127
    %v677 = vpop.permute.xlu0 %676
    %678 = vrot.lane.b32.xlu0 %v153, 127
    %v679 = vpop.permute.xlu0 %678
    %vm680 = vcmp.lt.s32.totalorder %v70, 127
    %v681 = vsel %vm680, %v673, %v677
    %v682 = vsel %vm680, %v675, %v679
    %v683 = vsel %vm680, %v669, %v673
    %v684 = vsel %vm680, %v671, %v675
    %v685 = vsel %vm680, %v665, %v669
    %v686 = vsel %vm680, %v667, %v671
    %v687 = vsel %vm680, %v677, %v665
    %v688 = vsel %vm680, %v679, %v667
    %v689 = vsel %vm410, 1, 0
    %v690 = vsel %vm411, 1, 0
    %v691 = vsel %vm412, 1, 0
    %v692 = vsel %vm413, 1, 0
    %vm693 = vcmp.eq.s32.totalorder %v689, 1
    %vm694 = vcmp.eq.s32.totalorder %v690, 1
    %vm695 = vcmp.eq.s32.totalorder %v691, 1
    %vm696 = vcmp.eq.s32.totalorder %v692, 1
    %v697 = vsel %vm693, %v685, 0.0
    %v698 = vsel %vm694, %v683, 0.0
    %v699 = vsel %vm695, %v681, 0.0
    %v700 = vsel %vm696, %v687, 0.0
    %v701 = vsel %vm693, %v686, 0.0
    %v702 = vsel %vm694, %v684, 0.0
    %v703 = vsel %vm695, %v682, 0.0
    %v704 = vsel %vm696, %v688, 0.0
    %v705 = vpack.c.bf16 %v701, %v697
    %v706 = vpack.c.bf16 %v702, %v698
    %v707 = vpack.c.bf16 %v703, %v699
    %v708 = vpack.c.bf16 %v704, %v700
    %v710 = vsel %vm274, %v168, 0
    %712 = vmatpush.bf16.msra.mxu0 0
    %713 = vmatpush.bf16.msra.mxu0 0
    %714 = vmatpush.bf16.msra.mxu0 0
    %715 = vmatpush.bf16.msra.mxu0 0
    %716 = vmatpush.bf16.msra.mxu0 0
    %717 = vmatpush.bf16.msra.mxu0 0
    %718 = vmatpush.bf16.msra.mxu0 0
    %719 = vmatpush.bf16.msra.mxu0 %v705
    %720 = vmatmul.bf16.gmra.mxu0 %v710
    %v721 = vpop.f32.mrf.mxu0
    %v722 = vadd.f32 0.0, %v721
    %v723 = vpop.f32.mrf.mxu0
    %724 = vdwg.mxu0
    %725 = vmatpush.bf16.msra.mxu0 0
    %726 = vmatpush.bf16.msra.mxu0 0
    %727 = vmatpush.bf16.msra.mxu0 0
    %728 = vmatpush.bf16.msra.mxu0 0
    %729 = vmatpush.bf16.msra.mxu0 0
    %730 = vmatpush.bf16.msra.mxu0 0
    %731 = vmatpush.bf16.msra.mxu0 0
    %732 = vmatpush.bf16.msra.mxu0 %v706
    %733 = vmatmul.bf16.gmra.mxu0 %v710
    %v734 = vpop.f32.mrf.mxu0
    %v735 = vadd.f32 0.0, %v734
    %v736 = vpop.f32.mrf.mxu0
    %737 = vdwg.mxu0
    %738 = vmatpush.bf16.msra.mxu0 0
    %739 = vmatpush.bf16.msra.mxu0 0
    %740 = vmatpush.bf16.msra.mxu0 0
    %741 = vmatpush.bf16.msra.mxu0 0
    %742 = vmatpush.bf16.msra.mxu0 0
    %743 = vmatpush.bf16.msra.mxu0 0
    %744 = vmatpush.bf16.msra.mxu0 0
    %745 = vmatpush.bf16.msra.mxu0 %v707
    %746 = vmatmul.bf16.gmra.mxu0 %v710
    %v747 = vpop.f32.mrf.mxu0
    %v748 = vadd.f32 0.0, %v747
    %v749 = vpop.f32.mrf.mxu0
    %750 = vdwg.mxu0
    %751 = vmatpush.bf16.msra.mxu0 0
    %752 = vmatpush.bf16.msra.mxu0 0
    %753 = vmatpush.bf16.msra.mxu0 0
    %754 = vmatpush.bf16.msra.mxu0 0
    %755 = vmatpush.bf16.msra.mxu0 0
    %756 = vmatpush.bf16.msra.mxu0 0
    %757 = vmatpush.bf16.msra.mxu0 0
    %758 = vmatpush.bf16.msra.mxu0 %v708
    %759 = vmatmul.bf16.gmra.mxu0 %v710
    %v760 = vpop.f32.mrf.mxu0
    %v761 = vadd.f32 0.0, %v760
    %v762 = vpop.f32.mrf.mxu0
    %763 = vdwg.mxu0
    %v764 = vadd.f32 %v660, %v722
    %v765 = vadd.f32 %v661, %v735
    %v766 = vadd.f32 %v662, %v748
    %v767 = vadd.f32 %v663, %v761
    %768 = vrot.lane.b32.xlu0 %v146, 113
    %v769 = vpop.permute.xlu0 %768
    %770 = vrot.lane.b32.xlu0 %v150, 113
    %v771 = vpop.permute.xlu0 %770
    %772 = vrot.lane.b32.xlu0 %v147, 113
    %v773 = vpop.permute.xlu0 %772
    %774 = vrot.lane.b32.xlu0 %v151, 113
    %v775 = vpop.permute.xlu0 %774
    %776 = vrot.lane.b32.xlu0 %v148, 113
    %v777 = vpop.permute.xlu0 %776
    %778 = vrot.lane.b32.xlu0 %v152, 113
    %v779 = vpop.permute.xlu0 %778
    %780 = vrot.lane.b32.xlu0 %v149, 113
    %v781 = vpop.permute.xlu0 %780
    %782 = vrot.lane.b32.xlu0 %v153, 113
    %v783 = vpop.permute.xlu0 %782
    %vm784 = vcmp.lt.s32.totalorder %v70, 113
    %v785 = vsel %vm784, %v777, %v781
    %v786 = vsel %vm784, %v779, %v783
    %v787 = vsel %vm784, %v773, %v777
    %v788 = vsel %vm784, %v775, %v779
    %v789 = vsel %vm784, %v769, %v773
    %v790 = vsel %vm784, %v771, %v775
    %v791 = vsel %vm784, %v781, %v769
    %v792 = vsel %vm784, %v783, %v771
    %vm793 = vcmp.lt.s32.totalorder %v82, 15
    %vm794 = vcmp.lt.s32.totalorder %v83, 15
    %vm795 = vcmp.lt.s32.totalorder %v84, 15
    %vm796 = vcmp.lt.s32.totalorder %v85, 15
    %vm797 = vmand %vm793, %vm201
    %vm798 = vmand %vm794, %vm202
    %vm799 = vmand %vm795, %vm203
    %vm800 = vmand %vm796, %vm204
    %v801 = vsel %vm797, 1, 0
    %v802 = vsel %vm798, 1, 0
    %v803 = vsel %vm799, 1, 0
    %v804 = vsel %vm800, 1, 0
    %vm805 = vcmp.eq.s32.totalorder %v801, 1
    %vm806 = vcmp.eq.s32.totalorder %v802, 1
    %vm807 = vcmp.eq.s32.totalorder %v803, 1
    %vm808 = vcmp.eq.s32.totalorder %v804, 1
    %v809 = vsel %vm805, %v789, 0.0
    %v810 = vsel %vm806, %v787, 0.0
    %v811 = vsel %vm807, %v785, 0.0
    %v812 = vsel %vm808, %v791, 0.0
    %v813 = vsel %vm805, %v790, 0.0
    %v814 = vsel %vm806, %v788, 0.0
    %v815 = vsel %vm807, %v786, 0.0
    %v816 = vsel %vm808, %v792, 0.0
    %v817 = vpack.c.bf16 %v813, %v809
    %v818 = vpack.c.bf16 %v814, %v810
    %v819 = vpack.c.bf16 %v815, %v811
    %v820 = vpack.c.bf16 %v816, %v812
    %v822 = vsel %vm274, %v169, 0
    %824 = vmatpush.bf16.msra.mxu0 0
    %825 = vmatpush.bf16.msra.mxu0 0
    %826 = vmatpush.bf16.msra.mxu0 0
    %827 = vmatpush.bf16.msra.mxu0 0
    %828 = vmatpush.bf16.msra.mxu0 0
    %829 = vmatpush.bf16.msra.mxu0 0
    %830 = vmatpush.bf16.msra.mxu0 0
    %831 = vmatpush.bf16.msra.mxu0 %v817
    %832 = vmatmul.bf16.gmra.mxu0 %v822
    %v833 = vpop.f32.mrf.mxu0
    %v834 = vadd.f32 0.0, %v833
    %v835 = vpop.f32.mrf.mxu0
    %836 = vdwg.mxu0
    %837 = vmatpush.bf16.msra.mxu0 0
    %838 = vmatpush.bf16.msra.mxu0 0
    %839 = vmatpush.bf16.msra.mxu0 0
    %840 = vmatpush.bf16.msra.mxu0 0
    %841 = vmatpush.bf16.msra.mxu0 0
    %842 = vmatpush.bf16.msra.mxu0 0
    %843 = vmatpush.bf16.msra.mxu0 0
    %844 = vmatpush.bf16.msra.mxu0 %v818
    %845 = vmatmul.bf16.gmra.mxu0 %v822
    %v846 = vpop.f32.mrf.mxu0
    %v847 = vadd.f32 0.0, %v846
    %v848 = vpop.f32.mrf.mxu0
    %849 = vdwg.mxu0
    %850 = vmatpush.bf16.msra.mxu0 0
    %851 = vmatpush.bf16.msra.mxu0 0
    %852 = vmatpush.bf16.msra.mxu0 0
    %853 = vmatpush.bf16.msra.mxu0 0
    %854 = vmatpush.bf16.msra.mxu0 0
    %855 = vmatpush.bf16.msra.mxu0 0
    %856 = vmatpush.bf16.msra.mxu0 0
    %857 = vmatpush.bf16.msra.mxu0 %v819
    %858 = vmatmul.bf16.gmra.mxu0 %v822
    %v859 = vpop.f32.mrf.mxu0
    %v860 = vadd.f32 0.0, %v859
    %v861 = vpop.f32.mrf.mxu0
    %862 = vdwg.mxu0
    %863 = vmatpush.bf16.msra.mxu0 0
    %864 = vmatpush.bf16.msra.mxu0 0
    %865 = vmatpush.bf16.msra.mxu0 0
    %866 = vmatpush.bf16.msra.mxu0 0
    %867 = vmatpush.bf16.msra.mxu0 0
    %868 = vmatpush.bf16.msra.mxu0 0
    %869 = vmatpush.bf16.msra.mxu0 0
    %870 = vmatpush.bf16.msra.mxu0 %v820
    %871 = vmatmul.bf16.gmra.mxu0 %v822
    %v872 = vpop.f32.mrf.mxu0
    %v873 = vadd.f32 0.0, %v872
    %v874 = vpop.f32.mrf.mxu0
    %875 = vdwg.mxu0
    %v876 = vadd.f32 %v764, %v834
    %v877 = vadd.f32 %v765, %v847
    %v878 = vadd.f32 %v766, %v860
    %v879 = vadd.f32 %v767, %v873
    %880 = vrot.lane.b32.xlu0 %v146, 112
    %v881 = vpop.permute.xlu0 %880
    %882 = vrot.lane.b32.xlu0 %v150, 112
    %v883 = vpop.permute.xlu0 %882
    %884 = vrot.lane.b32.xlu0 %v147, 112
    %v885 = vpop.permute.xlu0 %884
    %886 = vrot.lane.b32.xlu0 %v151, 112
    %v887 = vpop.permute.xlu0 %886
    %888 = vrot.lane.b32.xlu0 %v148, 112
    %v889 = vpop.permute.xlu0 %888
    %890 = vrot.lane.b32.xlu0 %v152, 112
    %v891 = vpop.permute.xlu0 %890
    %892 = vrot.lane.b32.xlu0 %v149, 112
    %v893 = vpop.permute.xlu0 %892
    %894 = vrot.lane.b32.xlu0 %v153, 112
    %v895 = vpop.permute.xlu0 %894
    %vm896 = vcmp.lt.s32.totalorder %v70, 112
    %v897 = vsel %vm896, %v889, %v893
    %v898 = vsel %vm896, %v891, %v895
    %v899 = vsel %vm896, %v885, %v889
    %v900 = vsel %vm896, %v887, %v891
    %v901 = vsel %vm896, %v881, %v885
    %v902 = vsel %vm896, %v883, %v887
    %v903 = vsel %vm896, %v893, %v881
    %v904 = vsel %vm896, %v895, %v883
    %v905 = vsel %vm793, 1, 0
    %v906 = vsel %vm794, 1, 0
    %v907 = vsel %vm795, 1, 0
    %v908 = vsel %vm796, 1, 0
    %vm909 = vcmp.eq.s32.totalorder %v905, 1
    %vm910 = vcmp.eq.s32.totalorder %v906, 1
    %vm911 = vcmp.eq.s32.totalorder %v907, 1
    %vm912 = vcmp.eq.s32.totalorder %v908, 1
    %v913 = vsel %vm909, %v901, 0.0
    %v914 = vsel %vm910, %v899, 0.0
    %v915 = vsel %vm911, %v897, 0.0
    %v916 = vsel %vm912, %v903, 0.0
    %v917 = vsel %vm909, %v902, 0.0
    %v918 = vsel %vm910, %v900, 0.0
    %v919 = vsel %vm911, %v898, 0.0
    %v920 = vsel %vm912, %v904, 0.0
    %v921 = vpack.c.bf16 %v917, %v913
    %v922 = vpack.c.bf16 %v918, %v914
    %v923 = vpack.c.bf16 %v919, %v915
    %v924 = vpack.c.bf16 %v920, %v916
    %v926 = vsel %vm274, %v170, 0
    %928 = vmatpush.bf16.msra.mxu0 0
    %929 = vmatpush.bf16.msra.mxu0 0
    %930 = vmatpush.bf16.msra.mxu0 0
    %931 = vmatpush.bf16.msra.mxu0 0
    %932 = vmatpush.bf16.msra.mxu0 0
    %933 = vmatpush.bf16.msra.mxu0 0
    %934 = vmatpush.bf16.msra.mxu0 0
    %935 = vmatpush.bf16.msra.mxu0 %v921
    %936 = vmatmul.bf16.gmra.mxu0 %v926
    %v937 = vpop.f32.mrf.mxu0
    %v938 = vadd.f32 0.0, %v937
    %v939 = vpop.f32.mrf.mxu0
    %940 = vdwg.mxu0
    %941 = vmatpush.bf16.msra.mxu0 0
    %942 = vmatpush.bf16.msra.mxu0 0
    %943 = vmatpush.bf16.msra.mxu0 0
    %944 = vmatpush.bf16.msra.mxu0 0
    %945 = vmatpush.bf16.msra.mxu0 0
    %946 = vmatpush.bf16.msra.mxu0 0
    %947 = vmatpush.bf16.msra.mxu0 0
    %948 = vmatpush.bf16.msra.mxu0 %v922
    %949 = vmatmul.bf16.gmra.mxu0 %v926
    %v950 = vpop.f32.mrf.mxu0
    %v951 = vadd.f32 0.0, %v950
    %v952 = vpop.f32.mrf.mxu0
    %953 = vdwg.mxu0
    %954 = vmatpush.bf16.msra.mxu0 0
    %955 = vmatpush.bf16.msra.mxu0 0
    %956 = vmatpush.bf16.msra.mxu0 0
    %957 = vmatpush.bf16.msra.mxu0 0
    %958 = vmatpush.bf16.msra.mxu0 0
    %959 = vmatpush.bf16.msra.mxu0 0
    %960 = vmatpush.bf16.msra.mxu0 0
    %961 = vmatpush.bf16.msra.mxu0 %v923
    %962 = vmatmul.bf16.gmra.mxu0 %v926
    %v963 = vpop.f32.mrf.mxu0
    %v964 = vadd.f32 0.0, %v963
    %v965 = vpop.f32.mrf.mxu0
    %966 = vdwg.mxu0
    %967 = vmatpush.bf16.msra.mxu0 0
    %968 = vmatpush.bf16.msra.mxu0 0
    %969 = vmatpush.bf16.msra.mxu0 0
    %970 = vmatpush.bf16.msra.mxu0 0
    %971 = vmatpush.bf16.msra.mxu0 0
    %972 = vmatpush.bf16.msra.mxu0 0
    %973 = vmatpush.bf16.msra.mxu0 0
    %974 = vmatpush.bf16.msra.mxu0 %v924
    %975 = vmatmul.bf16.gmra.mxu0 %v926
    %v976 = vpop.f32.mrf.mxu0
    %v977 = vadd.f32 0.0, %v976
    %v978 = vpop.f32.mrf.mxu0
    %979 = vdwg.mxu0
    %v980 = vadd.f32 %v876, %v938
    %v981 = vadd.f32 %v877, %v951
    %v982 = vadd.f32 %v878, %v964
    %v983 = vadd.f32 %v879, %v977
    %984 = vrot.lane.b32.xlu0 %v146, 111
    %v985 = vpop.permute.xlu0 %984
    %986 = vrot.lane.b32.xlu0 %v150, 111
    %v987 = vpop.permute.xlu0 %986
    %988 = vrot.lane.b32.xlu0 %v147, 111
    %v989 = vpop.permute.xlu0 %988
    %990 = vrot.lane.b32.xlu0 %v151, 111
    %v991 = vpop.permute.xlu0 %990
    %992 = vrot.lane.b32.xlu0 %v148, 111
    %v993 = vpop.permute.xlu0 %992
    %994 = vrot.lane.b32.xlu0 %v152, 111
    %v995 = vpop.permute.xlu0 %994
    %996 = vrot.lane.b32.xlu0 %v149, 111
    %v997 = vpop.permute.xlu0 %996
    %998 = vrot.lane.b32.xlu0 %v153, 111
    %v999 = vpop.permute.xlu0 %998
    %vm1000 = vcmp.lt.s32.totalorder %v70, 111
    %v1001 = vsel %vm1000, %v993, %v997
    %v1002 = vsel %vm1000, %v995, %v999
    %v1003 = vsel %vm1000, %v989, %v993
    %v1004 = vsel %vm1000, %v991, %v995
    %v1005 = vsel %vm1000, %v985, %v989
    %v1006 = vsel %vm1000, %v987, %v991
    %v1007 = vsel %vm1000, %v997, %v985
    %v1008 = vsel %vm1000, %v999, %v987
    %vm1009 = vmand %vm793, %vm410
    %vm1010 = vmand %vm794, %vm411
    %vm1011 = vmand %vm795, %vm412
    %vm1012 = vmand %vm796, %vm413
    %v1013 = vsel %vm1009, 1, 0
    %v1014 = vsel %vm1010, 1, 0
    %v1015 = vsel %vm1011, 1, 0
    %v1016 = vsel %vm1012, 1, 0
    %vm1017 = vcmp.eq.s32.totalorder %v1013, 1
    %vm1018 = vcmp.eq.s32.totalorder %v1014, 1
    %vm1019 = vcmp.eq.s32.totalorder %v1015, 1
    %vm1020 = vcmp.eq.s32.totalorder %v1016, 1
    %v1021 = vsel %vm1017, %v1005, 0.0
    %v1022 = vsel %vm1018, %v1003, 0.0
    %v1023 = vsel %vm1019, %v1001, 0.0
    %v1024 = vsel %vm1020, %v1007, 0.0
    %v1025 = vsel %vm1017, %v1006, 0.0
    %v1026 = vsel %vm1018, %v1004, 0.0
    %v1027 = vsel %vm1019, %v1002, 0.0
    %v1028 = vsel %vm1020, %v1008, 0.0
    %v1029 = vpack.c.bf16 %v1025, %v1021
    %v1030 = vpack.c.bf16 %v1026, %v1022
    %v1031 = vpack.c.bf16 %v1027, %v1023
    %v1032 = vpack.c.bf16 %v1028, %v1024
    %v1034 = vsel %vm274, %v171, 0
    %1036 = vmatpush.bf16.msra.mxu0 0
    %1037 = vmatpush.bf16.msra.mxu0 0
    %1038 = vmatpush.bf16.msra.mxu0 0
    %1039 = vmatpush.bf16.msra.mxu0 0
    %1040 = vmatpush.bf16.msra.mxu0 0
    %1041 = vmatpush.bf16.msra.mxu0 0
    %1042 = vmatpush.bf16.msra.mxu0 0
    %1043 = vmatpush.bf16.msra.mxu0 %v1029
    %1044 = vmatmul.bf16.gmra.mxu0 %v1034
    %v1045 = vpop.f32.mrf.mxu0
    %v1046 = vadd.f32 0.0, %v1045
    %v1047 = vpop.f32.mrf.mxu0
    %1048 = vdwg.mxu0
    %1049 = vmatpush.bf16.msra.mxu0 0
    %1050 = vmatpush.bf16.msra.mxu0 0
    %1051 = vmatpush.bf16.msra.mxu0 0
    %1052 = vmatpush.bf16.msra.mxu0 0
    %1053 = vmatpush.bf16.msra.mxu0 0
    %1054 = vmatpush.bf16.msra.mxu0 0
    %1055 = vmatpush.bf16.msra.mxu0 0
    %1056 = vmatpush.bf16.msra.mxu0 %v1030
    %1057 = vmatmul.bf16.gmra.mxu0 %v1034
    %v1058 = vpop.f32.mrf.mxu0
    %v1059 = vadd.f32 0.0, %v1058
    %v1060 = vpop.f32.mrf.mxu0
    %1061 = vdwg.mxu0
    %1062 = vmatpush.bf16.msra.mxu0 0
    %1063 = vmatpush.bf16.msra.mxu0 0
    %1064 = vmatpush.bf16.msra.mxu0 0
    %1065 = vmatpush.bf16.msra.mxu0 0
    %1066 = vmatpush.bf16.msra.mxu0 0
    %1067 = vmatpush.bf16.msra.mxu0 0
    %1068 = vmatpush.bf16.msra.mxu0 0
    %1069 = vmatpush.bf16.msra.mxu0 %v1031
    %1070 = vmatmul.bf16.gmra.mxu0 %v1034
    %v1071 = vpop.f32.mrf.mxu0
    %v1072 = vadd.f32 0.0, %v1071
    %v1073 = vpop.f32.mrf.mxu0
    %1074 = vdwg.mxu0
    %1075 = vmatpush.bf16.msra.mxu0 0
    %1076 = vmatpush.bf16.msra.mxu0 0
    %1077 = vmatpush.bf16.msra.mxu0 0
    %1078 = vmatpush.bf16.msra.mxu0 0
    %1079 = vmatpush.bf16.msra.mxu0 0
    %1080 = vmatpush.bf16.msra.mxu0 0
    %1081 = vmatpush.bf16.msra.mxu0 0
    %1082 = vmatpush.bf16.msra.mxu0 %v1032
    %1083 = vmatmul.bf16.gmra.mxu0 %v1034
    %v1084 = vpop.f32.mrf.mxu0
    %v1085 = vadd.f32 0.0, %v1084
    %v1086 = vpop.f32.mrf.mxu0
    %1087 = vdwg.mxu0
    %v1088 = vadd.f32 %v980, %v1046
    %v1089 = vadd.f32 %v981, %v1059
    %v1090 = vadd.f32 %v982, %v1072
    %v1091 = vadd.f32 %v983, %v1085
    %v1092 = vld [vmem:[%s2] sm:$0xff]
    %1094 = vset.pattern.permute.xlu0 0
    %1095 = vperm.xlu0 %1094, %v1092
    %v1096 = vpop.permute.xlu0 %1095
    %v1098 = vadd.f32 %v1088, %v1096
    %v1099 = vadd.f32 %v1089, %v1096
    %v1100 = vadd.f32 %v1090, %v1096
    %v1101 = vadd.f32 %v1091, %v1096
    %vm1102 = vcmp.ge.f32.partialorder %v1098, 0.0
    %vm1103 = vcmp.ge.f32.partialorder %v1099, 0.0
    %vm1104 = vcmp.ge.f32.partialorder %v1100, 0.0
    %vm1105 = vcmp.ge.f32.partialorder %v1101, 0.0
    %1106 = vset.pattern.permute.xlu0 1
    %1107 = vperm.xlu0 %1106, %v1092
    %v1108 = vpop.permute.xlu0 %1107
    %v1110 = vmul.f32 %v1108, %v1098
    %v1111 = vmul.f32 %v1108, %v1099
    %v1112 = vmul.f32 %v1108, %v1100
    %v1113 = vmul.f32 %v1108, %v1101
    %v1114 = vsel %vm1102, %v1098, %v1110
    %v1115 = vsel %vm1103, %v1099, %v1111
    %v1116 = vsel %vm1104, %v1100, %v1112
    %v1117 = vsel %vm1105, %v1101, %v1113
    %1118 = vrot.lane.b32.xlu0 %v1114, 16
    %v1119 = vpop.permute.xlu0 %1118
    %1120 = vrot.lane.b32.xlu0 %v1115, 16
    %v1121 = vpop.permute.xlu0 %1120
    %1122 = vrot.lane.b32.xlu0 %v1116, 16
    %v1123 = vpop.permute.xlu0 %1122
    %1124 = vrot.lane.b32.xlu0 %v1117, 16
    %v1125 = vpop.permute.xlu0 %1124
    %v1126 = vsel %vm245, %v1123, %v1125
    %v1127 = vsel %vm245, %v1121, %v1123
    %v1128 = vsel %vm245, %v1119, %v1121
    %v1129 = vsel %vm245, %v1125, %v1119
    %v1130 = vsel %vm258, %v1129, 0.0
    %v1131 = vsel %vm259, %v1128, 0.0
    %v1132 = vsel %vm260, %v1127, 0.0
    %v1133 = vsel %vm261, %v1126, 0.0
    %1134 = vset.pattern.permute.xlu0 2
    %1135 = vperm.xlu0 %1134, %v1092
    %v1136 = vpop.permute.xlu0 %1135
    %v1138 = vmul.f32 %v1130, %v1136
    %v1139 = vmul.f32 %v1131, %v1136
    %v1140 = vmul.f32 %v1132, %v1136
    %v1141 = vmul.f32 %v1133, %v1136
    %1142 = vset.pattern.permute.xlu0 3
    %1143 = vperm.xlu0 %1142, %v1092
    %v1144 = vpop.permute.xlu0 %1143
    %v1146 = vmul.f32 %v1114, %v1144
    %v1147 = vmul.f32 %v1115, %v1144
    %v1148 = vmul.f32 %v1116, %v1144
    %v1149 = vmul.f32 %v1117, %v1144
    %v1150 = vadd.f32 %v1138, %v1146
    %v1151 = vadd.f32 %v1139, %v1147
    %v1152 = vadd.f32 %v1140, %v1148
    %v1153 = vadd.f32 %v1141, %v1149
    %1154 = vrot.lane.b32.xlu0 %v1114, 112
    %v1155 = vpop.permute.xlu0 %1154
    %1156 = vrot.lane.b32.xlu0 %v1115, 112
    %v1157 = vpop.permute.xlu0 %1156
    %1158 = vrot.lane.b32.xlu0 %v1116, 112
    %v1159 = vpop.permute.xlu0 %1158
    %1160 = vrot.lane.b32.xlu0 %v1117, 112
    %v1161 = vpop.permute.xlu0 %1160
    %v1162 = vsel %vm896, %v1159, %v1161
    %v1163 = vsel %vm896, %v1157, %v1159
    %v1164 = vsel %vm896, %v1155, %v1157
    %v1165 = vsel %vm896, %v1161, %v1155
    %v1166 = vsel %vm909, %v1164, 0.0
    %v1167 = vsel %vm910, %v1163, 0.0
    %v1168 = vsel %vm911, %v1162, 0.0
    %v1169 = vsel %vm912, %v1165, 0.0
    %1170 = vset.pattern.permute.xlu0 4
    %1171 = vperm.xlu0 %1170, %v1092
    %v1172 = vpop.permute.xlu0 %1171
    %v1174 = vmul.f32 %v1166, %v1172
    %v1175 = vmul.f32 %v1167, %v1172
    %v1176 = vmul.f32 %v1168, %v1172
    %v1177 = vmul.f32 %v1169, %v1172
    %v1178 = vadd.f32 %v1150, %v1174
    %v1179 = vadd.f32 %v1151, %v1175
    %v1180 = vadd.f32 %v1152, %v1176
    %v1181 = vadd.f32 %v1153, %v1177
    %1182 = vset.pattern.permute.xlu0 5
    %1183 = vperm.xlu0 %1182, %v1092
    %v1184 = vpop.permute.xlu0 %1183
    %v1186 = vadd.f32 %v1178, %v1184
    %v1187 = vadd.f32 %v1179, %v1184
    %v1188 = vadd.f32 %v1180, %v1184
    %v1189 = vadd.f32 %v1181, %v1184
    %vm1190 = vcmp.ge.f32.partialorder %v1186, 0.0
    %vm1191 = vcmp.ge.f32.partialorder %v1187, 0.0
    %vm1192 = vcmp.ge.f32.partialorder %v1188, 0.0
    %vm1193 = vcmp.ge.f32.partialorder %v1189, 0.0
    %1194 = vset.pattern.permute.xlu0 6
    %1195 = vperm.xlu0 %1194, %v1092
    %v1196 = vpop.permute.xlu0 %1195
    %v1198 = vmul.f32 %v1196, %v1186
    %v1199 = vmul.f32 %v1196, %v1187
    %v1200 = vmul.f32 %v1196, %v1188
    %v1201 = vmul.f32 %v1196, %v1189
    %v1202 = vsel %vm1190, %v1186, %v1198
    %v1203 = vsel %vm1191, %v1187, %v1199
    %v1204 = vsel %vm1192, %v1188, %v1200
    %v1205 = vsel %vm1193, %v1189, %v1201
    %1206 = vrot.lane.b32.xlu0 %v1202, 1
    %v1207 = vpop.permute.xlu0 %1206
    %1208 = vrot.lane.b32.xlu0 %v1203, 1
    %v1209 = vpop.permute.xlu0 %1208
    %1210 = vrot.lane.b32.xlu0 %v1204, 1
    %v1211 = vpop.permute.xlu0 %1210
    %1212 = vrot.lane.b32.xlu0 %v1205, 1
    %v1213 = vpop.permute.xlu0 %1212
    %v1214 = vsel %vm513, %v1211, %v1213
    %v1215 = vsel %vm513, %v1209, %v1211
    %v1216 = vsel %vm513, %v1207, %v1209
    %v1217 = vsel %vm513, %v1213, %v1207
    %v1218 = vsel %vm526, %v1217, 0.0
    %v1219 = vsel %vm527, %v1216, 0.0
    %v1220 = vsel %vm528, %v1215, 0.0
    %v1221 = vsel %vm529, %v1214, 0.0
    %1222 = vset.pattern.permute.xlu0 7
    %1223 = vperm.xlu0 %1222, %v1092
    %v1224 = vpop.permute.xlu0 %1223
    %v1226 = vmul.f32 %v1218, %v1224
    %v1227 = vmul.f32 %v1219, %v1224
    %v1228 = vmul.f32 %v1220, %v1224
    %v1229 = vmul.f32 %v1221, %v1224
    %1230 = vset.pattern.permute.xlu0 8
    %1231 = vperm.xlu0 %1230, %v1092
    %v1232 = vpop.permute.xlu0 %1231
    %v1234 = vmul.f32 %v1202, %v1232
    %v1235 = vmul.f32 %v1203, %v1232
    %v1236 = vmul.f32 %v1204, %v1232
    %v1237 = vmul.f32 %v1205, %v1232
    %v1238 = vadd.f32 %v1226, %v1234
    %v1239 = vadd.f32 %v1227, %v1235
    %v1240 = vadd.f32 %v1228, %v1236
    %v1241 = vadd.f32 %v1229, %v1237
    %1242 = vrot.lane.b32.xlu0 %v1202, 127
    %v1243 = vpop.permute.xlu0 %1242
    %1244 = vrot.lane.b32.xlu0 %v1203, 127
    %v1245 = vpop.permute.xlu0 %1244
    %1246 = vrot.lane.b32.xlu0 %v1204, 127
    %v1247 = vpop.permute.xlu0 %1246
    %1248 = vrot.lane.b32.xlu0 %v1205, 127
    %v1249 = vpop.permute.xlu0 %1248
    %v1250 = vsel %vm680, %v1247, %v1249
    %v1251 = vsel %vm680, %v1245, %v1247
    %v1252 = vsel %vm680, %v1243, %v1245
    %v1253 = vsel %vm680, %v1249, %v1243
    %v1254 = vsel %vm693, %v1252, 0.0
    %v1255 = vsel %vm694, %v1251, 0.0
    %v1256 = vsel %vm695, %v1250, 0.0
    %v1257 = vsel %vm696, %v1253, 0.0
    %1258 = vset.pattern.permute.xlu0 9
    %1259 = vperm.xlu0 %1258, %v1092
    %v1260 = vpop.permute.xlu0 %1259
    %v1262 = vmul.f32 %v1254, %v1260
    %v1263 = vmul.f32 %v1255, %v1260
    %v1264 = vmul.f32 %v1256, %v1260
    %v1265 = vmul.f32 %v1257, %v1260
    %v1266 = vadd.f32 %v1238, %v1262
    %v1267 = vadd.f32 %v1239, %v1263
    %v1268 = vadd.f32 %v1240, %v1264
    %v1269 = vadd.f32 %v1241, %v1265
    %1270 = vset.pattern.permute.xlu0 10
    %1271 = vperm.xlu0 %1270, %v1092
    %v1272 = vpop.permute.xlu0 %1271
    %v1274 = vadd.f32 %v1266, %v1272
    %v1275 = vadd.f32 %v1267, %v1272
    %v1276 = vadd.f32 %v1268, %v1272
    %v1277 = vadd.f32 %v1269, %v1272
    %vm1278 = vcmp.ge.f32.partialorder %v1274, 0.0
    %vm1279 = vcmp.ge.f32.partialorder %v1275, 0.0
    %vm1280 = vcmp.ge.f32.partialorder %v1276, 0.0
    %vm1281 = vcmp.ge.f32.partialorder %v1277, 0.0
    %1282 = vset.pattern.permute.xlu0 11
    %1283 = vperm.xlu0 %1282, %v1092
    %v1284 = vpop.permute.xlu0 %1283
    %v1286 = vmul.f32 %v1284, %v1274
    %v1287 = vmul.f32 %v1284, %v1275
    %v1288 = vmul.f32 %v1284, %v1276
    %v1289 = vmul.f32 %v1284, %v1277
    %v1290 = vsel %vm1278, %v1274, %v1286
    %v1291 = vsel %vm1279, %v1275, %v1287
    %v1292 = vsel %vm1280, %v1276, %v1288
    %v1293 = vsel %vm1281, %v1277, %v1289
    %1294 = vrot.lane.b32.xlu0 %v1114, 32
    %v1295 = vpop.permute.xlu0 %1294
    %1296 = vrot.lane.b32.xlu0 %v1115, 32
    %v1297 = vpop.permute.xlu0 %1296
    %1298 = vrot.lane.b32.xlu0 %v1116, 32
    %v1299 = vpop.permute.xlu0 %1298
    %1300 = vrot.lane.b32.xlu0 %v1117, 32
    %v1301 = vpop.permute.xlu0 %1300
    %vm1302 = vcmp.lt.s32.totalorder %v70, 32
    %v1303 = vsel %vm1302, %v1299, %v1301
    %v1304 = vsel %vm1302, %v1297, %v1299
    %v1305 = vsel %vm1302, %v1295, %v1297
    %v1306 = vsel %vm1302, %v1301, %v1295
    %vm1307 = vcmp.ge.s32.totalorder %v82, 2
    %vm1308 = vcmp.ge.s32.totalorder %v83, 2
    %vm1309 = vcmp.ge.s32.totalorder %v84, 2
    %vm1310 = vcmp.ge.s32.totalorder %v85, 2
    %v1311 = vsel %vm1307, 1, 0
    %v1312 = vsel %vm1308, 1, 0
    %v1313 = vsel %vm1309, 1, 0
    %v1314 = vsel %vm1310, 1, 0
    %vm1315 = vcmp.eq.s32.totalorder %v1311, 1
    %vm1316 = vcmp.eq.s32.totalorder %v1312, 1
    %vm1317 = vcmp.eq.s32.totalorder %v1313, 1
    %vm1318 = vcmp.eq.s32.totalorder %v1314, 1
    %v1319 = vsel %vm1315, %v1306, 0.0
    %v1320 = vsel %vm1316, %v1305, 0.0
    %v1321 = vsel %vm1317, %v1304, 0.0
    %v1322 = vsel %vm1318, %v1303, 0.0
    %1323 = vset.pattern.permute.xlu0 12
    %1324 = vperm.xlu0 %1323, %v1092
    %v1325 = vpop.permute.xlu0 %1324
    %v1327 = vmul.f32 %v1319, %v1325
    %v1328 = vmul.f32 %v1320, %v1325
    %v1329 = vmul.f32 %v1321, %v1325
    %v1330 = vmul.f32 %v1322, %v1325
    %1331 = vset.pattern.permute.xlu0 13
    %1332 = vperm.xlu0 %1331, %v1092
    %v1333 = vpop.permute.xlu0 %1332
    %v1335 = vmul.f32 %v1114, %v1333
    %v1336 = vmul.f32 %v1115, %v1333
    %v1337 = vmul.f32 %v1116, %v1333
    %v1338 = vmul.f32 %v1117, %v1333
    %v1339 = vadd.f32 %v1327, %v1335
    %v1340 = vadd.f32 %v1328, %v1336
    %v1341 = vadd.f32 %v1329, %v1337
    %v1342 = vadd.f32 %v1330, %v1338
    %1343 = vrot.lane.b32.xlu0 %v1114, 96
    %v1344 = vpop.permute.xlu0 %1343
    %1345 = vrot.lane.b32.xlu0 %v1115, 96
    %v1346 = vpop.permute.xlu0 %1345
    %1347 = vrot.lane.b32.xlu0 %v1116, 96
    %v1348 = vpop.permute.xlu0 %1347
    %1349 = vrot.lane.b32.xlu0 %v1117, 96
    %v1350 = vpop.permute.xlu0 %1349
    %vm1351 = vcmp.lt.s32.totalorder %v70, 96
    %v1352 = vsel %vm1351, %v1348, %v1350
    %v1353 = vsel %vm1351, %v1346, %v1348
    %v1354 = vsel %vm1351, %v1344, %v1346
    %v1355 = vsel %vm1351, %v1350, %v1344
    %vm1356 = vcmp.lt.s32.totalorder %v82, 14
    %vm1357 = vcmp.lt.s32.totalorder %v83, 14
    %vm1358 = vcmp.lt.s32.totalorder %v84, 14
    %vm1359 = vcmp.lt.s32.totalorder %v85, 14
    %v1360 = vsel %vm1356, 1, 0
    %v1361 = vsel %vm1357, 1, 0
    %v1362 = vsel %vm1358, 1, 0
    %v1363 = vsel %vm1359, 1, 0
    %vm1364 = vcmp.eq.s32.totalorder %v1360, 1
    %vm1365 = vcmp.eq.s32.totalorder %v1361, 1
    %vm1366 = vcmp.eq.s32.totalorder %v1362, 1
    %vm1367 = vcmp.eq.s32.totalorder %v1363, 1
    %v1368 = vsel %vm1364, %v1354, 0.0
    %v1369 = vsel %vm1365, %v1353, 0.0
    %v1370 = vsel %vm1366, %v1352, 0.0
    %v1371 = vsel %vm1367, %v1355, 0.0
    %1372 = vset.pattern.permute.xlu0 14
    %1373 = vperm.xlu0 %1372, %v1092
    %v1374 = vpop.permute.xlu0 %1373
    %v1376 = vmul.f32 %v1368, %v1374
    %v1377 = vmul.f32 %v1369, %v1374
    %v1378 = vmul.f32 %v1370, %v1374
    %v1379 = vmul.f32 %v1371, %v1374
    %v1380 = vadd.f32 %v1339, %v1376
    %v1381 = vadd.f32 %v1340, %v1377
    %v1382 = vadd.f32 %v1341, %v1378
    %v1383 = vadd.f32 %v1342, %v1379
    %1384 = vset.pattern.permute.xlu0 15
    %1385 = vperm.xlu0 %1384, %v1092
    %v1386 = vpop.permute.xlu0 %1385
    %v1388 = vadd.f32 %v1380, %v1386
    %v1389 = vadd.f32 %v1381, %v1386
    %v1390 = vadd.f32 %v1382, %v1386
    %v1391 = vadd.f32 %v1383, %v1386
    %vm1392 = vcmp.ge.f32.partialorder %v1388, 0.0
    %vm1393 = vcmp.ge.f32.partialorder %v1389, 0.0
    %vm1394 = vcmp.ge.f32.partialorder %v1390, 0.0
    %vm1395 = vcmp.ge.f32.partialorder %v1391, 0.0
    %1396 = vset.pattern.permute.xlu0 16
    %1397 = vperm.xlu0 %1396, %v1092
    %v1398 = vpop.permute.xlu0 %1397
    %v1400 = vmul.f32 %v1398, %v1388
    %v1401 = vmul.f32 %v1398, %v1389
    %v1402 = vmul.f32 %v1398, %v1390
    %v1403 = vmul.f32 %v1398, %v1391
    %v1404 = vsel %vm1392, %v1388, %v1400
    %v1405 = vsel %vm1393, %v1389, %v1401
    %v1406 = vsel %vm1394, %v1390, %v1402
    %v1407 = vsel %vm1395, %v1391, %v1403
    %1408 = vrot.lane.b32.xlu0 %v1404, 2
    %v1409 = vpop.permute.xlu0 %1408
    %1410 = vrot.lane.b32.xlu0 %v1405, 2
    %v1411 = vpop.permute.xlu0 %1410
    %1412 = vrot.lane.b32.xlu0 %v1406, 2
    %v1413 = vpop.permute.xlu0 %1412
    %1414 = vrot.lane.b32.xlu0 %v1407, 2
    %v1415 = vpop.permute.xlu0 %1414
    %vm1416 = vcmp.lt.s32.totalorder %v70, 2
    %v1417 = vsel %vm1416, %v1413, %v1415
    %v1418 = vsel %vm1416, %v1411, %v1413
    %v1419 = vsel %vm1416, %v1409, %v1411
    %v1420 = vsel %vm1416, %v1415, %v1409
    %vm1421 = vcmp.ge.s32.totalorder %v78, 2
    %vm1422 = vcmp.ge.s32.totalorder %v79, 2
    %vm1423 = vcmp.ge.s32.totalorder %v80, 2
    %vm1424 = vcmp.ge.s32.totalorder %v81, 2
    %v1425 = vsel %vm1421, 1, 0
    %v1426 = vsel %vm1422, 1, 0
    %v1427 = vsel %vm1423, 1, 0
    %v1428 = vsel %vm1424, 1, 0
    %vm1429 = vcmp.eq.s32.totalorder %v1425, 1
    %vm1430 = vcmp.eq.s32.totalorder %v1426, 1
    %vm1431 = vcmp.eq.s32.totalorder %v1427, 1
    %vm1432 = vcmp.eq.s32.totalorder %v1428, 1
    %v1433 = vsel %vm1429, %v1420, 0.0
    %v1434 = vsel %vm1430, %v1419, 0.0
    %v1435 = vsel %vm1431, %v1418, 0.0
    %v1436 = vsel %vm1432, %v1417, 0.0
    %1437 = vset.pattern.permute.xlu0 17
    %1438 = vperm.xlu0 %1437, %v1092
    %v1439 = vpop.permute.xlu0 %1438
    %v1441 = vmul.f32 %v1433, %v1439
    %v1442 = vmul.f32 %v1434, %v1439
    %v1443 = vmul.f32 %v1435, %v1439
    %v1444 = vmul.f32 %v1436, %v1439
    %1445 = vset.pattern.permute.xlu0 18
    %1446 = vperm.xlu0 %1445, %v1092
    %v1447 = vpop.permute.xlu0 %1446
    %v1449 = vmul.f32 %v1404, %v1447
    %v1450 = vmul.f32 %v1405, %v1447
    %v1451 = vmul.f32 %v1406, %v1447
    %v1452 = vmul.f32 %v1407, %v1447
    %v1453 = vadd.f32 %v1441, %v1449
    %v1454 = vadd.f32 %v1442, %v1450
    %v1455 = vadd.f32 %v1443, %v1451
    %v1456 = vadd.f32 %v1444, %v1452
    %1457 = vrot.lane.b32.xlu0 %v1404, 126
    %v1458 = vpop.permute.xlu0 %1457
    %1459 = vrot.lane.b32.xlu0 %v1405, 126
    %v1460 = vpop.permute.xlu0 %1459
    %1461 = vrot.lane.b32.xlu0 %v1406, 126
    %v1462 = vpop.permute.xlu0 %1461
    %1463 = vrot.lane.b32.xlu0 %v1407, 126
    %v1464 = vpop.permute.xlu0 %1463
    %vm1465 = vcmp.lt.s32.totalorder %v70, 126
    %v1466 = vsel %vm1465, %v1462, %v1464
    %v1467 = vsel %vm1465, %v1460, %v1462
    %v1468 = vsel %vm1465, %v1458, %v1460
    %v1469 = vsel %vm1465, %v1464, %v1458
    %vm1470 = vcmp.lt.s32.totalorder %v78, 14
    %vm1471 = vcmp.lt.s32.totalorder %v79, 14
    %vm1472 = vcmp.lt.s32.totalorder %v80, 14
    %vm1473 = vcmp.lt.s32.totalorder %v81, 14
    %v1474 = vsel %vm1470, 1, 0
    %v1475 = vsel %vm1471, 1, 0
    %v1476 = vsel %vm1472, 1, 0
    %v1477 = vsel %vm1473, 1, 0
    %vm1478 = vcmp.eq.s32.totalorder %v1474, 1
    %vm1479 = vcmp.eq.s32.totalorder %v1475, 1
    %vm1480 = vcmp.eq.s32.totalorder %v1476, 1
    %vm1481 = vcmp.eq.s32.totalorder %v1477, 1
    %v1482 = vsel %vm1478, %v1468, 0.0
    %v1483 = vsel %vm1479, %v1467, 0.0
    %v1484 = vsel %vm1480, %v1466, 0.0
    %v1485 = vsel %vm1481, %v1469, 0.0
    %1486 = vset.pattern.permute.xlu0 19
    %1487 = vperm.xlu0 %1486, %v1092
    %v1488 = vpop.permute.xlu0 %1487
    %v1490 = vmul.f32 %v1482, %v1488
    %v1491 = vmul.f32 %v1483, %v1488
    %v1492 = vmul.f32 %v1484, %v1488
    %v1493 = vmul.f32 %v1485, %v1488
    %v1494 = vadd.f32 %v1453, %v1490
    %v1495 = vadd.f32 %v1454, %v1491
    %v1496 = vadd.f32 %v1455, %v1492
    %v1497 = vadd.f32 %v1456, %v1493
    %1498 = vset.pattern.permute.xlu0 20
    %1499 = vperm.xlu0 %1498, %v1092
    %v1500 = vpop.permute.xlu0 %1499
    %v1502 = vadd.f32 %v1494, %v1500
    %v1503 = vadd.f32 %v1495, %v1500
    %v1504 = vadd.f32 %v1496, %v1500
    %v1505 = vadd.f32 %v1497, %v1500
    %vm1506 = vcmp.ge.f32.partialorder %v1502, 0.0
    %vm1507 = vcmp.ge.f32.partialorder %v1503, 0.0
    %vm1508 = vcmp.ge.f32.partialorder %v1504, 0.0
    %vm1509 = vcmp.ge.f32.partialorder %v1505, 0.0
    %1510 = vset.pattern.permute.xlu0 21
    %1511 = vperm.xlu0 %1510, %v1092
    %v1512 = vpop.permute.xlu0 %1511
    %v1514 = vmul.f32 %v1512, %v1502
    %v1515 = vmul.f32 %v1512, %v1503
    %v1516 = vmul.f32 %v1512, %v1504
    %v1517 = vmul.f32 %v1512, %v1505
    %v1518 = vsel %vm1506, %v1502, %v1514
    %v1519 = vsel %vm1507, %v1503, %v1515
    %v1520 = vsel %vm1508, %v1504, %v1516
    %v1521 = vsel %vm1509, %v1505, %v1517
    %v1522 = vadd.f32 %v1290, %v1518
    %v1523 = vadd.f32 %v1291, %v1519
    %v1524 = vadd.f32 %v1292, %v1520
    %v1525 = vadd.f32 %v1293, %v1521
    %1526 = vset.pattern.permute.xlu0 22
    %1527 = vperm.xlu0 %1526, %v1092
    %v1528 = vpop.permute.xlu0 %1527
    %v1530 = vmul.f32 %v1522, %v1528
    %v1531 = vmul.f32 %v1523, %v1528
    %v1532 = vmul.f32 %v1524, %v1528
    %v1533 = vmul.f32 %v1525, %v1528
    %1534 = vset.pattern.permute.xlu0 23
    %1535 = vperm.xlu0 %1534, %v1092
    %v1536 = vpop.permute.xlu0 %1535
    %v1538 = vadd.f32 %v1530, %v1536
    %v1539 = vadd.f32 %v1531, %v1536
    %v1540 = vadd.f32 %v1532, %v1536
    %v1541 = vadd.f32 %v1533, %v1536
    %vm1542 = vcmp.ge.f32.partialorder %v1538, 0.0
    %vm1543 = vcmp.ge.f32.partialorder %v1539, 0.0
    %vm1544 = vcmp.ge.f32.partialorder %v1540, 0.0
    %vm1545 = vcmp.ge.f32.partialorder %v1541, 0.0
    %1546 = vset.pattern.permute.xlu0 24
    %1547 = vperm.xlu0 %1546, %v1092
    %v1548 = vpop.permute.xlu0 %1547
    %v1550 = vmul.f32 %v1548, %v1538
    %v1551 = vmul.f32 %v1548, %v1539
    %v1552 = vmul.f32 %v1548, %v1540
    %v1553 = vmul.f32 %v1548, %v1541
    %v1554 = vsel %vm1542, %v1538, %v1550
    %v1555 = vsel %vm1543, %v1539, %v1551
    %v1556 = vsel %vm1544, %v1540, %v1552
    %v1557 = vsel %vm1545, %v1541, %v1553
    %v1558 = vld [vmem:[%s4] sm:$0xff]
    %v1559 = vld [vmem:[%s4 + $0x8] sm:$0xff]
    %v1560 = vpack.c.bf16 %v1559, %v1558
    %v1561 = vpack.c.bf16 %v1554, %v1554
    %v1562 = vpack.c.bf16 %v1555, %v1555
    %v1563 = vpack.c.bf16 %v1556, %v1556
    %v1564 = vpack.c.bf16 %v1557, %v1557
    %1565 = vset.pattern.permute.xlu0 3
    %1566 = vperm.xlu0 %1565, %v86
    %v1567 = vpop.permute.xlu0 %1566
    %1569 = vset.pattern.permute.xlu0 3
    %1570 = vperm.xlu0 %1569, %v87
    %v1571 = vpop.permute.xlu0 %1570
    %vm1573 = vcmask 64512
    %v1575 = vsel %vm1573, %v1560, 0
    %vm1577 = vcmask 1043456
    %v1579 = vsel %vm1577, %v1561, 0
    %v1582 = vsel %vm1577, %v1562, 0
    %v1585 = vsel %vm1577, %v1563, 0
    %v1588 = vsel %vm1577, %v1564, 0
    %1590 = vmatpush.bf16.msra.mxu0 0
    %1591 = vmatpush.bf16.msra.mxu0 0
    %1592 = vmatpush.bf16.msra.mxu0 0
    %1593 = vmatpush.bf16.msra.mxu0 0
    %1594 = vmatpush.bf16.msra.mxu0 0
    %1595 = vmatpush.bf16.msra.mxu0 0
    %1596 = vmatpush.bf16.msra.mxu0 0
    %1597 = vmatpush.bf16.msra.mxu0 %v1579
    %1598 = vmatmul.bf16.gmra.mxu0 %v1575
    %v1599 = vpop.f32.mrf.mxu0
    %v1600 = vadd.f32 %v1567, %v1599
    %v1601 = vpop.f32.mrf.mxu0
    %v1602 = vadd.f32 %v1571, %v1601
    %1603 = vdwg.mxu0
    %1604 = vmatpush.bf16.msra.mxu0 0
    %1605 = vmatpush.bf16.msra.mxu0 0
    %1606 = vmatpush.bf16.msra.mxu0 0
    %1607 = vmatpush.bf16.msra.mxu0 0
    %1608 = vmatpush.bf16.msra.mxu0 0
    %1609 = vmatpush.bf16.msra.mxu0 0
    %1610 = vmatpush.bf16.msra.mxu0 0
    %1611 = vmatpush.bf16.msra.mxu0 %v1582
    %1612 = vmatmul.bf16.gmra.mxu0 %v1575
    %v1613 = vpop.f32.mrf.mxu0
    %v1614 = vadd.f32 %v1567, %v1613
    %v1615 = vpop.f32.mrf.mxu0
    %v1616 = vadd.f32 %v1571, %v1615
    %1617 = vdwg.mxu0
    %1618 = vmatpush.bf16.msra.mxu0 0
    %1619 = vmatpush.bf16.msra.mxu0 0
    %1620 = vmatpush.bf16.msra.mxu0 0
    %1621 = vmatpush.bf16.msra.mxu0 0
    %1622 = vmatpush.bf16.msra.mxu0 0
    %1623 = vmatpush.bf16.msra.mxu0 0
    %1624 = vmatpush.bf16.msra.mxu0 0
    %1625 = vmatpush.bf16.msra.mxu0 %v1585
    %1626 = vmatmul.bf16.gmra.mxu0 %v1575
    %v1627 = vpop.f32.mrf.mxu0
    %v1628 = vadd.f32 %v1567, %v1627
    %v1629 = vpop.f32.mrf.mxu0
    %v1630 = vadd.f32 %v1571, %v1629
    %1631 = vdwg.mxu0
    %1632 = vmatpush.bf16.msra.mxu0 0
    %1633 = vmatpush.bf16.msra.mxu0 0
    %1634 = vmatpush.bf16.msra.mxu0 0
    %1635 = vmatpush.bf16.msra.mxu0 0
    %1636 = vmatpush.bf16.msra.mxu0 0
    %1637 = vmatpush.bf16.msra.mxu0 0
    %1638 = vmatpush.bf16.msra.mxu0 0
    %1639 = vmatpush.bf16.msra.mxu0 %v1588
    %1640 = vmatmul.bf16.gmra.mxu0 %v1575
    %v1641 = vpop.f32.mrf.mxu0
    %v1642 = vadd.f32 %v1567, %v1641
    %v1643 = vpop.f32.mrf.mxu0
    %v1644 = vadd.f32 %v1571, %v1643
    %1645 = vdwg.mxu0
    %v1646 = vld [vmem:[%s5] sm:$0xff]
    %v1647 = vld [vmem:[%s5 + $0x8] sm:$0xff]
    %v1648 = vld [vmem:[%s6] sm:$0xff]
    %v1649 = vld [vmem:[%s6 + $0x8] sm:$0xff]
    %v1650 = vadd.f32 %v1600, %v1614
    %1651 = vadd.xlane.f32.xlu0 %v1650
    %v1652 = vpop.xlane.xlu0 %1651
    %v1653 = vadd.f32 %v1602, %v1616
    %1654 = vadd.xlane.f32.xlu0 %v1653
    %v1655 = vpop.xlane.xlu0 %1654
    %v1656 = vrcp.pop 256.0
    %v1657 = vmul.f32 256.0, %v1656
    %v1658 = vsub.f32 1.0, %v1657
    %v1659 = vmul.f32 %v1656, %v1658
    %v1660 = vadd.f32 %v1656, %v1659
    %vm1661 = vweird.f32 %v1656
    %v1662 = vsel %vm1661, %v1656, %v1660
    %v1663 = vmul.f32 %v1652, %v1662
    %v1664 = vmul.f32 %v1655, %v1662
    %v1665 = vmul.f32 %v1646, %v1663
    %v1666 = vmul.f32 %v1647, %v1664
    %vm1667 = vcmask 31744
    %v1668 = vsel %vm1667, %v1665, 0.0
    %v1669 = vsel %vm1667, %v1666, 0.0
    %v1670 = vadd.f32 %v1668, %v1669
    %v1671 = vrot.slane %v1670, 4
    %v1672 = vadd.f32 %v1670, %v1671
    %v1673 = vrot.slane %v1672, 2
    %v1674 = vadd.f32 %v1672, %v1673
    %v1675 = vrot.slane %v1674, 1
    %v1676 = vadd.f32 %v1674, %v1675
    %v1677 = vmax.f32 %v1676, 0.0
    %v1678 = vmul.f32 %v1648, %v1677
    %v1679 = vmul.f32 %v1649, %v1677
    %v1680 = vsel %vm1667, %v1678, 0.0
    %1681 = vadd.xlane.f32.xlu0 %v1680
    %v1682 = vpop.xlane.xlu0 %1681
    %v1683 = vsel %vm1667, %v1679, 0.0
    %1684 = vadd.xlane.f32.xlu0 %v1683
    %v1685 = vpop.xlane.xlu0 %1684
    %v1686 = vsub.f32 0.0, %v1682
    %v1687 = vsub.f32 0.0, %v1685
    %v1688 = vmul.f32 %v1686, 1.442695
    %v1689 = vpow.pop %v1688
    %v1690 = vmul.f32 %v1687, 1.442695
    %v1691 = vpow.pop %v1690
    %v1692 = vadd.f32 %v1689, 1.0
    %v1693 = vadd.f32 %v1691, 1.0
    %v1694 = vrcp.pop %v1692
    %v1695 = vrcp.pop %v1693
    %v1696 = vmul.f32 %v1600, %v1694
    %v1697 = vmul.f32 %v1614, %v1694
    %v1698 = vmul.f32 %v1602, %v1695
    %v1699 = vmul.f32 %v1616, %v1695
    %v1700 = vadd.f32 %v1696, %v60
    %v1701 = vadd.f32 %v1697, %v61
    %v1702 = vadd.f32 %v1698, %v62
    %v1703 = vadd.f32 %v1699, %v63
    %1704 = vst [vmem:[#allocation7] sm:$0xff] %v1700
    %1705 = vst [vmem:[#allocation7 + $0x8] sm:$0xff] %v1701
    %1706 = vst [vmem:[#allocation7 + $0x10] sm:$0xff] %v1702
    %1707 = vst [vmem:[#allocation7 + $0x18] sm:$0xff] %v1703
    %v1708 = vadd.f32 %v1628, %v1642
    %1709 = vadd.xlane.f32.xlu0 %v1708
    %v1710 = vpop.xlane.xlu0 %1709
    %v1711 = vadd.f32 %v1630, %v1644
    %1712 = vadd.xlane.f32.xlu0 %v1711
    %v1713 = vpop.xlane.xlu0 %1712
    %v1714 = vmul.f32 %v1710, %v1662
    %v1715 = vmul.f32 %v1713, %v1662
    %v1716 = vmul.f32 %v1646, %v1714
    %v1717 = vmul.f32 %v1647, %v1715
    %v1718 = vsel %vm1667, %v1716, 0.0
    %v1719 = vsel %vm1667, %v1717, 0.0
    %v1720 = vadd.f32 %v1718, %v1719
    %v1721 = vrot.slane %v1720, 4
    %v1722 = vadd.f32 %v1720, %v1721
    %v1723 = vrot.slane %v1722, 2
    %v1724 = vadd.f32 %v1722, %v1723
    %v1725 = vrot.slane %v1724, 1
    %v1726 = vadd.f32 %v1724, %v1725
    %v1727 = vmax.f32 %v1726, 0.0
    %v1728 = vmul.f32 %v1648, %v1727
    %v1729 = vmul.f32 %v1649, %v1727
    %v1730 = vsel %vm1667, %v1728, 0.0
    %1731 = vadd.xlane.f32.xlu0 %v1730
    %v1732 = vpop.xlane.xlu0 %1731
    %v1733 = vsel %vm1667, %v1729, 0.0
    %1734 = vadd.xlane.f32.xlu0 %v1733
    %v1735 = vpop.xlane.xlu0 %1734
    %v1736 = vsub.f32 0.0, %v1732
    %v1737 = vsub.f32 0.0, %v1735
    %v1738 = vmul.f32 %v1736, 1.442695
    %v1739 = vpow.pop %v1738
    %v1740 = vmul.f32 %v1737, 1.442695
    %v1741 = vpow.pop %v1740
    %v1742 = vadd.f32 %v1739, 1.0
    %v1743 = vadd.f32 %v1741, 1.0
    %v1744 = vrcp.pop %v1742
    %v1745 = vrcp.pop %v1743
    %v1746 = vmul.f32 %v1628, %v1744
    %v1747 = vmul.f32 %v1642, %v1744
    %v1748 = vmul.f32 %v1630, %v1745
    %v1749 = vmul.f32 %v1644, %v1745
    %v1750 = vadd.f32 %v1746, %v65
    %v1751 = vadd.f32 %v1747, %v66
    %v1752 = vadd.f32 %v1748, %v67
    %v1753 = vadd.f32 %v1749, %v68
    %s1754 = scalar_lea.vmem [#allocation7], 32
    %1755 = vst [vmem:[%s1754] sm:$0xff] %v1750
    %1756 = vst [vmem:[%s1754 + $0x8] sm:$0xff] %v1751
    %1757 = vst [vmem:[%s1754 + $0x10] sm:$0xff] %v1752
    %1758 = vst [vmem:[%s1754 + $0x18] sm:$0xff] %v1753
    // Predicated region
    $region38: #{tpu_custom_call.1} parent=1 // pred_check
      _
    $region39: #{tpu_custom_call.1} parent=1 // pred_check_branch
      %1760 = sbr.rel (0) target = $region41
    $region40: #{tpu_custom_call.1} parent=1 // pred_region
      %1762 = vsyncadd [#allocation4], 0
      %s1763 = sshll.u32 [#allocation7], 4
      %s1764 = int_to_ptr.vmem [resolvable:$true] %s1763
      %s1765 = sshll.u32 %s7, 4
      %s1766 = int_to_ptr.hbm [resolvable:$true] %s1765
      %1771 = dma.vmem_to_hbm [thread:$0]  %s1764, 1024, %s1766, [#allocation4], 256, 256, 16
    $region41: #{tpu_custom_call.1} parent=1 // pred_fallthru
      _
    // Predicated region
    $region42: #{tpu_custom_call.1} parent=1 // pred_check
      _
    $region43: #{tpu_custom_call.1} parent=1 // pred_check_branch
      %1773 = sbr.rel (0) target = $region45
    $region44: #{tpu_custom_call.1} parent=1 // pred_region
      %1775 = dma.done [#allocation4], 1024
    $region45: #{tpu_custom_call.1} parent=1 // pred_fallthru
      _
    %1776 = vsyncpa [#allocation3], 1
    %1777 = vsyncpa [#allocation6], 1
    %1778 = vsyncpa [#allocation4], 1

</llo_original>
